<compile_context>
chip_gen: v5e
topology: v5e:2x2
jax: 0.10.0
libtpu: 0.0.40
codegen_flags: <defaults>
</compile_context>

<pallas_src>
import jax
import jax.numpy as jnp
from jax import lax
from jax.experimental import pallas as pl
from jax.experimental.pallas import tpu as pltpu

SUBLANES = 8
BT_CAP = 256                      # max batch-tile rows fed to the per-step matmul
FF_SLAB_BYTES = 6 * 1024 * 1024   # budget for the (rows, 4D) f32 slab in the ff tail

PT_PARAMS = ("wd", "bd", "wih0", "whh0", "b0", "wih1", "whh1", "b1",
             "g1", "be1", "w1", "bl1", "w2", "bl2", "g2", "be2")
KERNEL_PARAMS = ("w0", "b0", "whh0", "wih1", "whh1", "b1",
                 "g1", "be1", "w1", "bl1", "w2", "bl2", "g2", "be2")


def residual_lstm_kernel(
    x_ref,                         # (S, Bt, D)   f32   time-major batch tile
    w0_ref, b0_ref,                # (D, 4H) bf16, (1, 4H) f32  downsample∘layer-0 in-proj
    whh0_ref,                      # (H, 4H) bf16               layer-0 recurrent
    wih1_ref, whh1_ref, b1_ref,    # (H, 4H) bf16 x2, (1, 4H) f32  layer-1
    g1_ref, be1_ref,               # (1, H)  f32                norm1
    w1_ref, bl1_ref,               # (H, 4D) bf16, (1, 4D) f32  linear1
    w2_ref, bl2_ref,               # (4D, D) bf16, (1, D)  f32  linear2
    g2_ref, be2_ref,               # (1, D)  f32                norm2
    out_ref,                       # (S, Bt, D)   f32
    gates_s,                       # scratch (S, Bt, 4H) f32 — reused by both layers
    y_s,                           # scratch (S, Bt, H)  f32 — reused by both layers
):
    S, Bt, D = x_ref.shape
    H = D // 2
    G = 4 * H
    rows = S * Bt
    eps = 1e-5
    unroll = S if S <= 16 else 8   # static; full unroll for short sequences

    # ---- layer-0 input projection for ALL timesteps (downsample folded into
    #      W0 in the wrapper): a single large bf16 MXU pass. -----------------
    x_bf = x_ref[...].reshape(rows, D).astype(jnp.bfloat16)
    gates_s[...] = (
        jnp.dot(x_bf, w0_ref[...], preferred_element_type=jnp.float32) + b0_ref[...]
    ).reshape(S, Bt, G)

    # ---- sequential LSTM recurrence; gate order (i,f,o,g): one sigmoid over
    #      [:, :3H] and one tanh over [:, 3H:] per step. ---------------------
    def run_layer(whh):            # whh: (H, 4H) bf16 value (load hoisted out of loop)
        def step(t, carry):
            h, c = carry
            g = gates_s[t] + jnp.dot(h.astype(jnp.bfloat16), whh,
                                     preferred_element_type=jnp.float32)
            sig = jax.nn.sigmoid(g[:, : 3 * H])
            i_g = sig[:, 0:H]
            f_g = sig[:, H:2 * H]
            o_g = sig[:, 2 * H:3 * H]
            g_g = jnp.tanh(g[:, 3 * H:])
            c = f_g * c + i_g * g_g
            h = o_g * jnp.tanh(c)
            y_s[t] = h
            return (h, c)

        zeros = jnp.zeros((Bt, H), jnp.float32)
        lax.fori_loop(0, S, step, (zeros, zeros), unroll=unroll)

    run_layer(whh0_ref[...])                                   # layer 0 -> y_s

    # inter-layer dropout(0.2) == identity in eval mode
    gates_s[...] = (
        jnp.dot(y_s[...].reshape(rows, H).astype(jnp.bfloat16), wih1_ref[...],
                preferred_element_type=jnp.float32) + b1_ref[...]
    ).reshape(S, Bt, G)
    run_layer(whh1_ref[...])                                   # layer 1 overwrites y_s

    # ---- dropout1 (id) + LN1 + linear1/ReLU + linear2 + dropout2 (id) +
    #      residual + LN2, chunked along time so the (rows, 4D) slab stays
    #      within FF_SLAB_BYTES regardless of D / S. -------------------------
    max_rows = max(Bt, FF_SLAB_BYTES // (4 * D * 4))
    tff = max(1, min(S, max_rows // Bt))

    def ff_chunk(t0, tc):
        r = tc * Bt
        y = y_s[pl.ds(t0, tc)].reshape(r, H)
        mu1 = jnp.mean(y, axis=-1, keepdims=True)
        var1 = jnp.mean((y - mu1) ** 2, axis=-1, keepdims=True)
        y = (y - mu1) * lax.rsqrt(var1 + eps) * g1_ref[...] + be1_ref[...]

        h1 = jnp.dot(y.astype(jnp.bfloat16), w1_ref[...],
                     preferred_element_type=jnp.float32) + bl1_ref[...]
        h1 = jnp.maximum(h1, 0.0)
        h2 = jnp.dot(h1.astype(jnp.bfloat16), w2_ref[...],
                     preferred_element_type=jnp.float32) + bl2_ref[...]

        xres = x_ref[pl.ds(t0, tc)].reshape(r, D)              # re-read x (short live range)
        z = xres + h2
        mu2 = jnp.mean(z, axis=-1, keepdims=True)
        var2 = jnp.mean((z - mu2) ** 2, axis=-1, keepdims=True)
        z = (z - mu2) * lax.rsqrt(var2 + eps) * g2_ref[...] + be2_ref[...]
        out_ref[pl.ds(t0, tc)] = z.reshape(tc, Bt, D)

    n_chunks = -(-S // tff)
    if n_chunks <= 4:
        # few chunks: static unroll
        t0 = 0
        for _ in range(n_chunks):
            tc = min(tff, S - t0)
            ff_chunk(t0, tc)
            t0 += tc
    else:
        # many chunks: bounded live ranges via an scf.for loop
        n_full = S // tff

        @pl.loop(0, n_full)
        def _(ci):
            ff_chunk(pl.multiple_of(ci * tff, tff), tff)

        rem = S - n_full * tff
        if rem:
            ff_chunk(n_full * tff, rem)


# ------------------------------ parameter prep ------------------------------
def make_params(key, d_model):
    """Deterministic synthetic parameters (PyTorch shapes, pre-transposed to (in, out)).
    LSTM gate order here is PyTorch's (i, f, g, o); bias = b_ih + b_hh folded."""
    H = d_model // 2
    ks = jax.random.split(key, 16)
    n = iter(range(16))
    r = lambda shape, scale=0.1: (jax.random.normal(ks[next(n)], shape, jnp.float32) * scale)
    return dict(
        wd=r((d_model, H)), bd=r((1, H)),
        wih0=r((H, 4 * H)), whh0=r((H, 4 * H)), b0=r((1, 4 * H)),
        wih1=r((H, 4 * H)), whh1=r((H, 4 * H)), b1=r((1, 4 * H)),
        g1=jnp.ones((1, H), jnp.float32), be1=jnp.zeros((1, H), jnp.float32),
        w1=r((H, 4 * d_model)), bl1=r((1, 4 * d_model)),
        w2=r((4 * d_model, d_model)), bl2=r((1, d_model)),
        g2=jnp.ones((1, d_model), jnp.float32), be2=jnp.zeros((1, d_model), jnp.float32),
    )


def _reorder_gates(params):
    """Permute LSTM gate column blocks (i,f,g,o) -> (i,f,o,g) so the kernel can
    apply one sigmoid over the first 3H columns and one tanh over the last H."""
    def perm(a):
        i_g, f_g, g_g, o_g = jnp.split(a, 4, axis=-1)
        return jnp.concatenate([i_g, f_g, o_g, g_g], axis=-1)

    q = dict(params)
    for k in ("wih0", "whh0", "b0", "wih1", "whh1", "b1"):
        q[k] = perm(params[k])
    return q


def _prep_params(params):
    """Gate reorder, fold downsample into the layer-0 input projection, and
    pre-cast matmul weights to bf16 (biases / LN params stay f32)."""
    p = _reorder_gates(params)
    bf = jnp.bfloat16
    w0 = p["wd"] @ p["wih0"]                 # (D, 4H)
    b0 = p["bd"] @ p["wih0"] + p["b0"]       # (1, 4H)
    return dict(
        w0=w0.astype(bf), b0=b0,
        whh0=p["whh0"].astype(bf),
        wih1=p["wih1"].astype(bf), whh1=p["whh1"].astype(bf), b1=p["b1"],
        g1=p["g1"], be1=p["be1"],
        w1=p["w1"].astype(bf), bl1=p["bl1"],
        w2=p["w2"].astype(bf), bl2=p["bl2"],
        g2=p["g2"], be2=p["be2"],
    )


# ------------------------------ tiling helpers -------------------------------
def _vmem_limit_bytes():
    """Generation-aware scoped-VMEM limit (v7x TC has 64 MiB; v5e/v6e 128 MiB)."""
    kind = ""
    try:
        kind = jax.devices()[0].device_kind.lower()
    except Exception:
        pass
    if "v7" in kind:
        return 48 * 1024 * 1024
    if "v5" in kind or "v6" in kind:
        return 100 * 1024 * 1024
    return 48 * 1024 * 1024


def _pick_bt(B_pad, S, D, H, vmem_limit):
    """Largest batch tile (multiple of 8, divides B_pad, <= BT_CAP) whose
    recurrence working set fits in a fraction of the VMEM budget."""
    budget = int(vmem_limit * 0.6)

    def need(bt):
        gates = S * bt * 4 * H * 4          # gates_s scratch (f32)
        ys = S * bt * H * 4                 # y_s scratch (f32)
        xo = 2 * 2 * S * bt * D * 4         # double-buffered x and out blocks
        return gates + ys + xo

    bt = max(SUBLANES, (min(B_pad, BT_CAP) // SUBLANES) * SUBLANES)
    while bt > SUBLANES and (need(bt) > budget or B_pad % bt):
        bt -= SUBLANES
    while B_pad % bt:
        bt -= SUBLANES
    # v7x megacore: prefer >=2 grid steps when each half still feeds the MXU
    # >=128 rows (near-zero cost on single-TC v5e/v6e).
    if bt == B_pad and B_pad >= 2 * 128 and (B_pad // 2) % SUBLANES == 0:
        bt = B_pad // 2
    return bt


# ---------------------------------- wrapper ----------------------------------
@jax.jit
def residual_lstm_forward(x, params):
    """x: (B, S, D) float32 -> (B, S, D) float32 (eval-mode forward)."""
    B, S, D = x.shape
    H = D // 2
    p = _prep_params(params)

    # Pad batch to a multiple of 8 sublanes (padded rows computed then dropped).
    B_pad = -(-B // SUBLANES) * SUBLANES
    if B_pad != B:
        x = jnp.pad(x, ((0, B_pad - B), (0, 0), (0, 0)))

    vmem_limit = _vmem_limit_bytes()
    Bt = _pick_bt(B_pad, S, D, H, vmem_limit)
    nb = B_pad // Bt

    # Contiguous per-tile layout: (nb, S, Bt, D) flattened to (nb*S, Bt, D) so
    # each grid block's x/out DMA is a single contiguous descriptor.
    x_t = x.reshape(nb, Bt, S, D).transpose(0, 2, 1, 3).reshape(nb * S, Bt, D)

    xo_spec = pl.BlockSpec((S, Bt, D), lambda b: (b, 0, 0))
    w_specs = [pl.BlockSpec(p[k].shape, lambda b: (0, 0)) for k in KERNEL_PARAMS]

    out_t = pl.pallas_call(
        residual_lstm_kernel,
        out_shape=jax.ShapeDtypeStruct((nb * S, Bt, D), jnp.float32),
        grid_spec=pltpu.PrefetchScalarGridSpec(
            num_scalar_prefetch=0,
            grid=(nb,),
            in_specs=[xo_spec] + w_specs,
            out_specs=xo_spec,
            scratch_shapes=[pltpu.VMEM((S, Bt, 4 * H), jnp.float32),   # gates (both layers)
                            pltpu.VMEM((S, Bt, H), jnp.float32)],      # hidden states
        ),
        compiler_params=pltpu.CompilerParams(
            dimension_semantics=("parallel",),   # megacore-sharded batch tiles on v7x
            vmem_limit_bytes=vmem_limit,
        ),
    )(x_t, *[p[k] for k in KERNEL_PARAMS])

    out = out_t.reshape(nb, S, Bt, D).transpose(0, 2, 1, 3).reshape(B_pad, S, D)
    return out[:B]


# ----------------------------- pure-JAX reference ----------------------------
def residual_lstm_reference(x, p):
    x = jnp.transpose(x, (1, 0, 2))                        # (S, B, D)
    S, B, D = x.shape
    H = D // 2
    res = x
    y = x @ p["wd"] + p["bd"]

    def run_layer(inp, wih, whh, b):
        def step(carry, xt):
            h, c = carry
            gates = xt @ wih + h @ whh + b
            i_g, f_g, g_g, o_g = jnp.split(gates, 4, axis=-1)
            i_g = jax.nn.sigmoid(i_g)
            f_g = jax.nn.sigmoid(f_g)
            g_g = jnp.tanh(g_g)
            o_g = jax.nn.sigmoid(o_g)
            c = f_g * c + i_g * g_g
            h = o_g * jnp.tanh(c)
            return (h, c), h
        zeros = jnp.zeros((B, H), jnp.float32)
        _, ys = lax.scan(step, (zeros, zeros), inp)
        return ys

    y = run_layer(y, p["wih0"], p["whh0"], p["b0"])
    y = run_layer(y, p["wih1"], p["whh1"], p["b1"])

    def ln(v, g, b):
        mu = v.mean(-1, keepdims=True)
        var = ((v - mu) ** 2).mean(-1, keepdims=True)
        return (v - mu) * lax.rsqrt(var + 1e-5) * g + b

    y = ln(y, p["g1"], p["be1"])
    y = jnp.maximum(y @ p["w1"] + p["bl1"], 0.0)
    y = y @ p["w2"] + p["bl2"]
    y = ln(res + y, p["g2"], p["be2"])
    return jnp.transpose(y, (1, 0, 2))


if __name__ == "__main__":
    B, S, D = 2, 8, 64           # batch, seq, d_model  (hidden = D // 2 = 32)
    key = jax.random.PRNGKey(0)
    kx, kp = jax.random.split(key)
    x = jax.random.normal(kx, (B, S, D), jnp.float32)
    params = make_params(kp, D)

    out = jax.block_until_ready(residual_lstm_forward(x, params))
    assert out.shape == (B, S, D), out.shape

    ref = jax.block_until_ready(residual_lstm_reference(x, params))
    assert jnp.all(jnp.isfinite(out))
    # bf16 MXU operands vs f32 reference: tolerance relaxed per perf review.
    assert jnp.allclose(out, ref, atol=5e-2, rtol=5e-2), float(jnp.max(jnp.abs(out - ref)))

    print("KERNEL_OK")
</pallas_src>

<mosaic_0001>
module attributes {stable_mosaic.version = 11 : i64} {
  func.func @residual_lstm_kernel(%arg0: i32, %arg1: memref<8x8x64xf32, #tpu.memory_space<vmem>>, %arg2: memref<64x128xbf16, #tpu.memory_space<vmem>>, %arg3: memref<1x128xf32, #tpu.memory_space<vmem>>, %arg4: memref<32x128xbf16, #tpu.memory_space<vmem>>, %arg5: memref<32x128xbf16, #tpu.memory_space<vmem>>, %arg6: memref<32x128xbf16, #tpu.memory_space<vmem>>, %arg7: memref<1x128xf32, #tpu.memory_space<vmem>>, %arg8: memref<1x32xf32, #tpu.memory_space<vmem>>, %arg9: memref<1x32xf32, #tpu.memory_space<vmem>>, %arg10: memref<32x256xbf16, #tpu.memory_space<vmem>>, %arg11: memref<1x256xf32, #tpu.memory_space<vmem>>, %arg12: memref<256x64xbf16, #tpu.memory_space<vmem>>, %arg13: memref<1x64xf32, #tpu.memory_space<vmem>>, %arg14: memref<1x64xf32, #tpu.memory_space<vmem>>, %arg15: memref<1x64xf32, #tpu.memory_space<vmem>>, %arg16: memref<8x8x64xf32, #tpu.memory_space<vmem>>, %arg17: memref<8x8x128xf32, #tpu.memory_space<vmem>>, %arg18: memref<8x8x32xf32, #tpu.memory_space<vmem>>) attributes {dimension_semantics = [#tpu.dimension_semantics<parallel>], iteration_bounds = array<i64: 1>, scalar_prefetch = 0 : i64, scratch_operands = 2 : i64, tpu.core_type = #tpu.core_type<tc>, window_params = [{transform_indices = @transform_0, window_bounds = array<i64: 8, 8, 64>}, {pipeline_mode = #tpu.pipeline_mode<synchronous>, transform_indices = @transform_1, window_bounds = array<i64: 64, 128>}, {pipeline_mode = #tpu.pipeline_mode<synchronous>, transform_indices = @transform_2, window_bounds = array<i64: 1, 128>}, {pipeline_mode = #tpu.pipeline_mode<synchronous>, transform_indices = @transform_3, window_bounds = array<i64: 32, 128>}, {pipeline_mode = #tpu.pipeline_mode<synchronous>, transform_indices = @transform_4, window_bounds = array<i64: 32, 128>}, {pipeline_mode = #tpu.pipeline_mode<synchronous>, transform_indices = @transform_5, window_bounds = array<i64: 32, 128>}, {pipeline_mode = #tpu.pipeline_mode<synchronous>, transform_indices = @transform_6, window_bounds = array<i64: 1, 128>}, {pipeline_mode = #tpu.pipeline_mode<synchronous>, transform_indices = @transform_7, window_bounds = array<i64: 1, 32>}, {pipeline_mode = #tpu.pipeline_mode<synchronous>, transform_indices = @transform_8, window_bounds = array<i64: 1, 32>}, {pipeline_mode = #tpu.pipeline_mode<synchronous>, transform_indices = @transform_9, window_bounds = array<i64: 32, 256>}, {pipeline_mode = #tpu.pipeline_mode<synchronous>, transform_indices = @transform_10, window_bounds = array<i64: 1, 256>}, {pipeline_mode = #tpu.pipeline_mode<synchronous>, transform_indices = @transform_11, window_bounds = array<i64: 256, 64>}, {pipeline_mode = #tpu.pipeline_mode<synchronous>, transform_indices = @transform_12, window_bounds = array<i64: 1, 64>}, {pipeline_mode = #tpu.pipeline_mode<synchronous>, transform_indices = @transform_13, window_bounds = array<i64: 1, 64>}, {pipeline_mode = #tpu.pipeline_mode<synchronous>, transform_indices = @transform_14, window_bounds = array<i64: 1, 64>}, {transform_indices = @transform_15, window_bounds = array<i64: 8, 8, 64>}]} {
    %c0 = arith.constant 0 : index
    %c0_0 = arith.constant 0 : index
    %c0_1 = arith.constant 0 : index
    %0 = vector.load %arg1[%c0, %c0_0, %c0_1] : memref<8x8x64xf32, #tpu.memory_space<vmem>>, vector<8x8x64xf32>
    %1 = vector.shape_cast %0 : vector<8x8x64xf32> to vector<64x64xf32>
    %2 = arith.truncf %1 : vector<64x64xf32> to vector<64x64xbf16>
    %c0_2 = arith.constant 0 : index
    %c0_3 = arith.constant 0 : index
    %3 = vector.load %arg2[%c0_2, %c0_3] : memref<64x128xbf16, #tpu.memory_space<vmem>>, vector<64x128xbf16>
    %cst = arith.constant dense<0.000000e+00> : vector<64x128xf32>
    %4 = tpu.matmul %2, %3, %cst {dimension_numbers = #tpu.dot_dimension_numbers<[1], [0], [0], [1], [0, 0, 1, 1], [], []>} : vector<64x64xbf16>, vector<64x128xbf16>, vector<64x128xf32> -> vector<64x128xf32>
    %c0_4 = arith.constant 0 : index
    %c0_5 = arith.constant 0 : index
    %5 = vector.load %arg3[%c0_4, %c0_5] : memref<1x128xf32, #tpu.memory_space<vmem>>, vector<1x128xf32>
    %6 = vector.broadcast %5 : vector<1x128xf32> to vector<64x128xf32>
    %7 = arith.addf %4, %6 : vector<64x128xf32>
    %8 = vector.shape_cast %7 : vector<64x128xf32> to vector<8x8x128xf32>
    %c0_6 = arith.constant 0 : index
    %c0_7 = arith.constant 0 : index
    %c0_8 = arith.constant 0 : index
    %9 = vector.load %arg17[%c0_6, %c0_7, %c0_8] : memref<8x8x128xf32, #tpu.memory_space<vmem>>, vector<8x8x128xf32>
    tpu.vector_store %arg17[%c0_6, %c0_7, %c0_8], %8 {strides = array<i32>} : memref<8x8x128xf32, #tpu.memory_space<vmem>>, vector<8x8x128xf32>,
    %c0_9 = arith.constant 0 : index
    %c0_10 = arith.constant 0 : index
    %10 = vector.load %arg4[%c0_9, %c0_10] : memref<32x128xbf16, #tpu.memory_space<vmem>>, vector<32x128xbf16>
    %cst_11 = arith.constant 0.000000e+00 : f32
    %11 = vector.broadcast %cst_11 : f32 to vector<8x32xf32>
    %c0_i32 = arith.constant 0 : i32
    %12 = arith.index_cast %c0_i32 : i32 to index
    %c0_12 = arith.constant 0 : index
    %c0_13 = arith.constant 0 : index
    %13 = vector.load %arg17[%12, %c0_12, %c0_13] : memref<8x8x128xf32, #tpu.memory_space<vmem>>, vector<1x8x128xf32>
    %14 = vector.shape_cast %13 : vector<1x8x128xf32> to vector<8x128xf32>
    %15 = arith.truncf %11 : vector<8x32xf32> to vector<8x32xbf16>
    %cst_14 = arith.constant dense<0.000000e+00> : vector<8x128xf32>
    %16 = tpu.matmul %15, %10, %cst_14 {dimension_numbers = #tpu.dot_dimension_numbers<[1], [0], [0], [1], [0, 0, 1, 1], [], []>} : vector<8x32xbf16>, vector<32x128xbf16>, vector<8x128xf32> -> vector<8x128xf32>
    %17 = arith.addf %14, %16 : vector<8x128xf32>
    %18 = vector.extract_strided_slice %17 {offsets = [0, 0], sizes = [8, 96], strides = [1, 1]} : vector<8x128xf32> to vector<8x96xf32>
    %19 = arith.negf %18 : vector<8x96xf32>
    %20 = math.exp %19 : vector<8x96xf32>
    %cst_15 = arith.constant 1.000000e+00 : f32
    %21 = vector.broadcast %cst_15 : f32 to vector<8x96xf32>
    %22 = arith.addf %21, %20 : vector<8x96xf32>
    %23 = arith.divf %21, %22 : vector<8x96xf32>
    %24 = vector.extract_strided_slice %23 {offsets = [0, 0], sizes = [8, 32], strides = [1, 1]} : vector<8x96xf32> to vector<8x32xf32>
    %25 = vector.extract_strided_slice %23 {offsets = [0, 32], sizes = [8, 32], strides = [1, 1]} : vector<8x96xf32> to vector<8x32xf32>
    %26 = vector.extract_strided_slice %23 {offsets = [0, 64], sizes = [8, 32], strides = [1, 1]} : vector<8x96xf32> to vector<8x32xf32>
    %27 = vector.extract_strided_slice %17 {offsets = [0, 96], sizes = [8, 32], strides = [1, 1]} : vector<8x128xf32> to vector<8x32xf32>
    %28 = math.tanh %27 : vector<8x32xf32>
    %29 = arith.mulf %25, %11 : vector<8x32xf32>
    %30 = arith.mulf %24, %28 : vector<8x32xf32>
    %31 = arith.addf %29, %30 : vector<8x32xf32>
    %32 = math.tanh %31 : vector<8x32xf32>
    %33 = arith.mulf %26, %32 : vector<8x32xf32>
    %34 = arith.index_cast %c0_i32 : i32 to index
    %c0_16 = arith.constant 0 : index
    %c0_17 = arith.constant 0 : index
    %35 = vector.load %arg18[%34, %c0_16, %c0_17] : memref<8x8x32xf32, #tpu.memory_space<vmem>>, vector<1x8x32xf32>
    %36 = vector.shape_cast %35 : vector<1x8x32xf32> to vector<8x32xf32>
    %37 = vector.shape_cast %33 : vector<8x32xf32> to vector<1x8x32xf32>
    tpu.vector_store %arg18[%34, %c0_16, %c0_17], %37 {strides = array<i32>} : memref<8x8x32xf32, #tpu.memory_space<vmem>>, vector<1x8x32xf32>,
    %c1_i32 = arith.constant 1 : i32
    %38 = arith.index_cast %c1_i32 : i32 to index
    %c0_18 = arith.constant 0 : index
    %c0_19 = arith.constant 0 : index
    %39 = vector.load %arg17[%38, %c0_18, %c0_19] : memref<8x8x128xf32, #tpu.memory_space<vmem>>, vector<1x8x128xf32>
    %40 = vector.shape_cast %39 : vector<1x8x128xf32> to vector<8x128xf32>
    %41 = arith.truncf %33 : vector<8x32xf32> to vector<8x32xbf16>
    %cst_20 = arith.constant dense<0.000000e+00> : vector<8x128xf32>
    %42 = tpu.matmul %41, %10, %cst_20 {dimension_numbers = #tpu.dot_dimension_numbers<[1], [0], [0], [1], [0, 0, 1, 1], [], []>} : vector<8x32xbf16>, vector<32x128xbf16>, vector<8x128xf32> -> vector<8x128xf32>
    %43 = arith.addf %40, %42 : vector<8x128xf32>
    %44 = vector.extract_strided_slice %43 {offsets = [0, 0], sizes = [8, 96], strides = [1, 1]} : vector<8x128xf32> to vector<8x96xf32>
    %45 = arith.negf %44 : vector<8x96xf32>
    %46 = math.exp %45 : vector<8x96xf32>
    %cst_21 = arith.constant 1.000000e+00 : f32
    %47 = vector.broadcast %cst_21 : f32 to vector<8x96xf32>
    %48 = arith.addf %47, %46 : vector<8x96xf32>
    %49 = arith.divf %47, %48 : vector<8x96xf32>
    %50 = vector.extract_strided_slice %49 {offsets = [0, 0], sizes = [8, 32], strides = [1, 1]} : vector<8x96xf32> to vector<8x32xf32>
    %51 = vector.extract_strided_slice %49 {offsets = [0, 32], sizes = [8, 32], strides = [1, 1]} : vector<8x96xf32> to vector<8x32xf32>
    %52 = vector.extract_strided_slice %49 {offsets = [0, 64], sizes = [8, 32], strides = [1, 1]} : vector<8x96xf32> to vector<8x32xf32>
    %53 = vector.extract_strided_slice %43 {offsets = [0, 96], sizes = [8, 32], strides = [1, 1]} : vector<8x128xf32> to vector<8x32xf32>
    %54 = math.tanh %53 : vector<8x32xf32>
    %55 = arith.mulf %51, %31 : vector<8x32xf32>
    %56 = arith.mulf %50, %54 : vector<8x32xf32>
    %57 = arith.addf %55, %56 : vector<8x32xf32>
    %58 = math.tanh %57 : vector<8x32xf32>
    %59 = arith.mulf %52, %58 : vector<8x32xf32>
    %60 = arith.index_cast %c1_i32 : i32 to index
    %c0_22 = arith.constant 0 : index
    %c0_23 = arith.constant 0 : index
    %61 = vector.load %arg18[%60, %c0_22, %c0_23] : memref<8x8x32xf32, #tpu.memory_space<vmem>>, vector<1x8x32xf32>
    %62 = vector.shape_cast %61 : vector<1x8x32xf32> to vector<8x32xf32>
    %63 = vector.shape_cast %59 : vector<8x32xf32> to vector<1x8x32xf32>
    tpu.vector_store %arg18[%60, %c0_22, %c0_23], %63 {strides = array<i32>} : memref<8x8x32xf32, #tpu.memory_space<vmem>>, vector<1x8x32xf32>,
    %c2_i32 = arith.constant 2 : i32
    %64 = arith.index_cast %c2_i32 : i32 to index
    %c0_24 = arith.constant 0 : index
    %c0_25 = arith.constant 0 : index
    %65 = vector.load %arg17[%64, %c0_24, %c0_25] : memref<8x8x128xf32, #tpu.memory_space<vmem>>, vector<1x8x128xf32>
    %66 = vector.shape_cast %65 : vector<1x8x128xf32> to vector<8x128xf32>
    %67 = arith.truncf %59 : vector<8x32xf32> to vector<8x32xbf16>
    %cst_26 = arith.constant dense<0.000000e+00> : vector<8x128xf32>
    %68 = tpu.matmul %67, %10, %cst_26 {dimension_numbers = #tpu.dot_dimension_numbers<[1], [0], [0], [1], [0, 0, 1, 1], [], []>} : vector<8x32xbf16>, vector<32x128xbf16>, vector<8x128xf32> -> vector<8x128xf32>
    %69 = arith.addf %66, %68 : vector<8x128xf32>
    %70 = vector.extract_strided_slice %69 {offsets = [0, 0], sizes = [8, 96], strides = [1, 1]} : vector<8x128xf32> to vector<8x96xf32>
    %71 = arith.negf %70 : vector<8x96xf32>
    %72 = math.exp %71 : vector<8x96xf32>
    %cst_27 = arith.constant 1.000000e+00 : f32
    %73 = vector.broadcast %cst_27 : f32 to vector<8x96xf32>
    %74 = arith.addf %73, %72 : vector<8x96xf32>
    %75 = arith.divf %73, %74 : vector<8x96xf32>
    %76 = vector.extract_strided_slice %75 {offsets = [0, 0], sizes = [8, 32], strides = [1, 1]} : vector<8x96xf32> to vector<8x32xf32>
    %77 = vector.extract_strided_slice %75 {offsets = [0, 32], sizes = [8, 32], strides = [1, 1]} : vector<8x96xf32> to vector<8x32xf32>
    %78 = vector.extract_strided_slice %75 {offsets = [0, 64], sizes = [8, 32], strides = [1, 1]} : vector<8x96xf32> to vector<8x32xf32>
    %79 = vector.extract_strided_slice %69 {offsets = [0, 96], sizes = [8, 32], strides = [1, 1]} : vector<8x128xf32> to vector<8x32xf32>
    %80 = math.tanh %79 : vector<8x32xf32>
    %81 = arith.mulf %77, %57 : vector<8x32xf32>
    %82 = arith.mulf %76, %80 : vector<8x32xf32>
    %83 = arith.addf %81, %82 : vector<8x32xf32>
    %84 = math.tanh %83 : vector<8x32xf32>
    %85 = arith.mulf %78, %84 : vector<8x32xf32>
    %86 = arith.index_cast %c2_i32 : i32 to index
    %c0_28 = arith.constant 0 : index
    %c0_29 = arith.constant 0 : index
    %87 = vector.load %arg18[%86, %c0_28, %c0_29] : memref<8x8x32xf32, #tpu.memory_space<vmem>>, vector<1x8x32xf32>
    %88 = vector.shape_cast %87 : vector<1x8x32xf32> to vector<8x32xf32>
    %89 = vector.shape_cast %85 : vector<8x32xf32> to vector<1x8x32xf32>
    tpu.vector_store %arg18[%86, %c0_28, %c0_29], %89 {strides = array<i32>} : memref<8x8x32xf32, #tpu.memory_space<vmem>>, vector<1x8x32xf32>,
    %c3_i32 = arith.constant 3 : i32
    %90 = arith.index_cast %c3_i32 : i32 to index
    %c0_30 = arith.constant 0 : index
    %c0_31 = arith.constant 0 : index
    %91 = vector.load %arg17[%90, %c0_30, %c0_31] : memref<8x8x128xf32, #tpu.memory_space<vmem>>, vector<1x8x128xf32>
    %92 = vector.shape_cast %91 : vector<1x8x128xf32> to vector<8x128xf32>
    %93 = arith.truncf %85 : vector<8x32xf32> to vector<8x32xbf16>
    %cst_32 = arith.constant dense<0.000000e+00> : vector<8x128xf32>
    %94 = tpu.matmul %93, %10, %cst_32 {dimension_numbers = #tpu.dot_dimension_numbers<[1], [0], [0], [1], [0, 0, 1, 1], [], []>} : vector<8x32xbf16>, vector<32x128xbf16>, vector<8x128xf32> -> vector<8x128xf32>
    %95 = arith.addf %92, %94 : vector<8x128xf32>
    %96 = vector.extract_strided_slice %95 {offsets = [0, 0], sizes = [8, 96], strides = [1, 1]} : vector<8x128xf32> to vector<8x96xf32>
    %97 = arith.negf %96 : vector<8x96xf32>
    %98 = math.exp %97 : vector<8x96xf32>
    %cst_33 = arith.constant 1.000000e+00 : f32
    %99 = vector.broadcast %cst_33 : f32 to vector<8x96xf32>
    %100 = arith.addf %99, %98 : vector<8x96xf32>
    %101 = arith.divf %99, %100 : vector<8x96xf32>
    %102 = vector.extract_strided_slice %101 {offsets = [0, 0], sizes = [8, 32], strides = [1, 1]} : vector<8x96xf32> to vector<8x32xf32>
    %103 = vector.extract_strided_slice %101 {offsets = [0, 32], sizes = [8, 32], strides = [1, 1]} : vector<8x96xf32> to vector<8x32xf32>
    %104 = vector.extract_strided_slice %101 {offsets = [0, 64], sizes = [8, 32], strides = [1, 1]} : vector<8x96xf32> to vector<8x32xf32>
    %105 = vector.extract_strided_slice %95 {offsets = [0, 96], sizes = [8, 32], strides = [1, 1]} : vector<8x128xf32> to vector<8x32xf32>
    %106 = math.tanh %105 : vector<8x32xf32>
    %107 = arith.mulf %103, %83 : vector<8x32xf32>
    %108 = arith.mulf %102, %106 : vector<8x32xf32>
    %109 = arith.addf %107, %108 : vector<8x32xf32>
    %110 = math.tanh %109 : vector<8x32xf32>
    %111 = arith.mulf %104, %110 : vector<8x32xf32>
    %112 = arith.index_cast %c3_i32 : i32 to index
    %c0_34 = arith.constant 0 : index
    %c0_35 = arith.constant 0 : index
    %113 = vector.load %arg18[%112, %c0_34, %c0_35] : memref<8x8x32xf32, #tpu.memory_space<vmem>>, vector<1x8x32xf32>
    %114 = vector.shape_cast %113 : vector<1x8x32xf32> to vector<8x32xf32>
    %115 = vector.shape_cast %111 : vector<8x32xf32> to vector<1x8x32xf32>
    tpu.vector_store %arg18[%112, %c0_34, %c0_35], %115 {strides = array<i32>} : memref<8x8x32xf32, #tpu.memory_space<vmem>>, vector<1x8x32xf32>,
    %c4_i32 = arith.constant 4 : i32
    %116 = arith.index_cast %c4_i32 : i32 to index
    %c0_36 = arith.constant 0 : index
    %c0_37 = arith.constant 0 : index
    %117 = vector.load %arg17[%116, %c0_36, %c0_37] : memref<8x8x128xf32, #tpu.memory_space<vmem>>, vector<1x8x128xf32>
    %118 = vector.shape_cast %117 : vector<1x8x128xf32> to vector<8x128xf32>
    %119 = arith.truncf %111 : vector<8x32xf32> to vector<8x32xbf16>
    %cst_38 = arith.constant dense<0.000000e+00> : vector<8x128xf32>
    %120 = tpu.matmul %119, %10, %cst_38 {dimension_numbers = #tpu.dot_dimension_numbers<[1], [0], [0], [1], [0, 0, 1, 1], [], []>} : vector<8x32xbf16>, vector<32x128xbf16>, vector<8x128xf32> -> vector<8x128xf32>
    %121 = arith.addf %118, %120 : vector<8x128xf32>
    %122 = vector.extract_strided_slice %121 {offsets = [0, 0], sizes = [8, 96], strides = [1, 1]} : vector<8x128xf32> to vector<8x96xf32>
    %123 = arith.negf %122 : vector<8x96xf32>
    %124 = math.exp %123 : vector<8x96xf32>
    %cst_39 = arith.constant 1.000000e+00 : f32
    %125 = vector.broadcast %cst_39 : f32 to vector<8x96xf32>
    %126 = arith.addf %125, %124 : vector<8x96xf32>
    %127 = arith.divf %125, %126 : vector<8x96xf32>
    %128 = vector.extract_strided_slice %127 {offsets = [0, 0], sizes = [8, 32], strides = [1, 1]} : vector<8x96xf32> to vector<8x32xf32>
    %129 = vector.extract_strided_slice %127 {offsets = [0, 32], sizes = [8, 32], strides = [1, 1]} : vector<8x96xf32> to vector<8x32xf32>
    %130 = vector.extract_strided_slice %127 {offsets = [0, 64], sizes = [8, 32], strides = [1, 1]} : vector<8x96xf32> to vector<8x32xf32>
    %131 = vector.extract_strided_slice %121 {offsets = [0, 96], sizes = [8, 32], strides = [1, 1]} : vector<8x128xf32> to vector<8x32xf32>
    %132 = math.tanh %131 : vector<8x32xf32>
    %133 = arith.mulf %129, %109 : vector<8x32xf32>
    %134 = arith.mulf %128, %132 : vector<8x32xf32>
    %135 = arith.addf %133, %134 : vector<8x32xf32>
    %136 = math.tanh %135 : vector<8x32xf32>
    %137 = arith.mulf %130, %136 : vector<8x32xf32>
    %138 = arith.index_cast %c4_i32 : i32 to index
    %c0_40 = arith.constant 0 : index
    %c0_41 = arith.constant 0 : index
    %139 = vector.load %arg18[%138, %c0_40, %c0_41] : memref<8x8x32xf32, #tpu.memory_space<vmem>>, vector<1x8x32xf32>
    %140 = vector.shape_cast %139 : vector<1x8x32xf32> to vector<8x32xf32>
    %141 = vector.shape_cast %137 : vector<8x32xf32> to vector<1x8x32xf32>
    tpu.vector_store %arg18[%138, %c0_40, %c0_41], %141 {strides = array<i32>} : memref<8x8x32xf32, #tpu.memory_space<vmem>>, vector<1x8x32xf32>,
    %c5_i32 = arith.constant 5 : i32
    %142 = arith.index_cast %c5_i32 : i32 to index
    %c0_42 = arith.constant 0 : index
    %c0_43 = arith.constant 0 : index
    %143 = vector.load %arg17[%142, %c0_42, %c0_43] : memref<8x8x128xf32, #tpu.memory_space<vmem>>, vector<1x8x128xf32>
    %144 = vector.shape_cast %143 : vector<1x8x128xf32> to vector<8x128xf32>
    %145 = arith.truncf %137 : vector<8x32xf32> to vector<8x32xbf16>
    %cst_44 = arith.constant dense<0.000000e+00> : vector<8x128xf32>
    %146 = tpu.matmul %145, %10, %cst_44 {dimension_numbers = #tpu.dot_dimension_numbers<[1], [0], [0], [1], [0, 0, 1, 1], [], []>} : vector<8x32xbf16>, vector<32x128xbf16>, vector<8x128xf32> -> vector<8x128xf32>
    %147 = arith.addf %144, %146 : vector<8x128xf32>
    %148 = vector.extract_strided_slice %147 {offsets = [0, 0], sizes = [8, 96], strides = [1, 1]} : vector<8x128xf32> to vector<8x96xf32>
    %149 = arith.negf %148 : vector<8x96xf32>
    %150 = math.exp %149 : vector<8x96xf32>
    %cst_45 = arith.constant 1.000000e+00 : f32
    %151 = vector.broadcast %cst_45 : f32 to vector<8x96xf32>
    %152 = arith.addf %151, %150 : vector<8x96xf32>
    %153 = arith.divf %151, %152 : vector<8x96xf32>
    %154 = vector.extract_strided_slice %153 {offsets = [0, 0], sizes = [8, 32], strides = [1, 1]} : vector<8x96xf32> to vector<8x32xf32>
    %155 = vector.extract_strided_slice %153 {offsets = [0, 32], sizes = [8, 32], strides = [1, 1]} : vector<8x96xf32> to vector<8x32xf32>
    %156 = vector.extract_strided_slice %153 {offsets = [0, 64], sizes = [8, 32], strides = [1, 1]} : vector<8x96xf32> to vector<8x32xf32>
    %157 = vector.extract_strided_slice %147 {offsets = [0, 96], sizes = [8, 32], strides = [1, 1]} : vector<8x128xf32> to vector<8x32xf32>
    %158 = math.tanh %157 : vector<8x32xf32>
    %159 = arith.mulf %155, %135 : vector<8x32xf32>
    %160 = arith.mulf %154, %158 : vector<8x32xf32>
    %161 = arith.addf %159, %160 : vector<8x32xf32>
    %162 = math.tanh %161 : vector<8x32xf32>
    %163 = arith.mulf %156, %162 : vector<8x32xf32>
    %164 = arith.index_cast %c5_i32 : i32 to index
    %c0_46 = arith.constant 0 : index
    %c0_47 = arith.constant 0 : index
    %165 = vector.load %arg18[%164, %c0_46, %c0_47] : memref<8x8x32xf32, #tpu.memory_space<vmem>>, vector<1x8x32xf32>
    %166 = vector.shape_cast %165 : vector<1x8x32xf32> to vector<8x32xf32>
    %167 = vector.shape_cast %163 : vector<8x32xf32> to vector<1x8x32xf32>
    tpu.vector_store %arg18[%164, %c0_46, %c0_47], %167 {strides = array<i32>} : memref<8x8x32xf32, #tpu.memory_space<vmem>>, vector<1x8x32xf32>,
    %c6_i32 = arith.constant 6 : i32
    %168 = arith.index_cast %c6_i32 : i32 to index
    %c0_48 = arith.constant 0 : index
    %c0_49 = arith.constant 0 : index
    %169 = vector.load %arg17[%168, %c0_48, %c0_49] : memref<8x8x128xf32, #tpu.memory_space<vmem>>, vector<1x8x128xf32>
    %170 = vector.shape_cast %169 : vector<1x8x128xf32> to vector<8x128xf32>
    %171 = arith.truncf %163 : vector<8x32xf32> to vector<8x32xbf16>
    %cst_50 = arith.constant dense<0.000000e+00> : vector<8x128xf32>
    %172 = tpu.matmul %171, %10, %cst_50 {dimension_numbers = #tpu.dot_dimension_numbers<[1], [0], [0], [1], [0, 0, 1, 1], [], []>} : vector<8x32xbf16>, vector<32x128xbf16>, vector<8x128xf32> -> vector<8x128xf32>
    %173 = arith.addf %170, %172 : vector<8x128xf32>
    %174 = vector.extract_strided_slice %173 {offsets = [0, 0], sizes = [8, 96], strides = [1, 1]} : vector<8x128xf32> to vector<8x96xf32>
    %175 = arith.negf %174 : vector<8x96xf32>
    %176 = math.exp %175 : vector<8x96xf32>
    %cst_51 = arith.constant 1.000000e+00 : f32
    %177 = vector.broadcast %cst_51 : f32 to vector<8x96xf32>
    %178 = arith.addf %177, %176 : vector<8x96xf32>
    %179 = arith.divf %177, %178 : vector<8x96xf32>
    %180 = vector.extract_strided_slice %179 {offsets = [0, 0], sizes = [8, 32], strides = [1, 1]} : vector<8x96xf32> to vector<8x32xf32>
    %181 = vector.extract_strided_slice %179 {offsets = [0, 32], sizes = [8, 32], strides = [1, 1]} : vector<8x96xf32> to vector<8x32xf32>
    %182 = vector.extract_strided_slice %179 {offsets = [0, 64], sizes = [8, 32], strides = [1, 1]} : vector<8x96xf32> to vector<8x32xf32>
    %183 = vector.extract_strided_slice %173 {offsets = [0, 96], sizes = [8, 32], strides = [1, 1]} : vector<8x128xf32> to vector<8x32xf32>
    %184 = math.tanh %183 : vector<8x32xf32>
    %185 = arith.mulf %181, %161 : vector<8x32xf32>
    %186 = arith.mulf %180, %184 : vector<8x32xf32>
    %187 = arith.addf %185, %186 : vector<8x32xf32>
    %188 = math.tanh %187 : vector<8x32xf32>
    %189 = arith.mulf %182, %188 : vector<8x32xf32>
    %190 = arith.index_cast %c6_i32 : i32 to index
    %c0_52 = arith.constant 0 : index
    %c0_53 = arith.constant 0 : index
    %191 = vector.load %arg18[%190, %c0_52, %c0_53] : memref<8x8x32xf32, #tpu.memory_space<vmem>>, vector<1x8x32xf32>
    %192 = vector.shape_cast %191 : vector<1x8x32xf32> to vector<8x32xf32>
    %193 = vector.shape_cast %189 : vector<8x32xf32> to vector<1x8x32xf32>
    tpu.vector_store %arg18[%190, %c0_52, %c0_53], %193 {strides = array<i32>} : memref<8x8x32xf32, #tpu.memory_space<vmem>>, vector<1x8x32xf32>,
    %c7_i32 = arith.constant 7 : i32
    %194 = arith.index_cast %c7_i32 : i32 to index
    %c0_54 = arith.constant 0 : index
    %c0_55 = arith.constant 0 : index
    %195 = vector.load %arg17[%194, %c0_54, %c0_55] : memref<8x8x128xf32, #tpu.memory_space<vmem>>, vector<1x8x128xf32>
    %196 = vector.shape_cast %195 : vector<1x8x128xf32> to vector<8x128xf32>
    %197 = arith.truncf %189 : vector<8x32xf32> to vector<8x32xbf16>
    %cst_56 = arith.constant dense<0.000000e+00> : vector<8x128xf32>
    %198 = tpu.matmul %197, %10, %cst_56 {dimension_numbers = #tpu.dot_dimension_numbers<[1], [0], [0], [1], [0, 0, 1, 1], [], []>} : vector<8x32xbf16>, vector<32x128xbf16>, vector<8x128xf32> -> vector<8x128xf32>
    %199 = arith.addf %196, %198 : vector<8x128xf32>
    %200 = vector.extract_strided_slice %199 {offsets = [0, 0], sizes = [8, 96], strides = [1, 1]} : vector<8x128xf32> to vector<8x96xf32>
    %201 = arith.negf %200 : vector<8x96xf32>
    %202 = math.exp %201 : vector<8x96xf32>
    %cst_57 = arith.constant 1.000000e+00 : f32
    %203 = vector.broadcast %cst_57 : f32 to vector<8x96xf32>
    %204 = arith.addf %203, %202 : vector<8x96xf32>
    %205 = arith.divf %203, %204 : vector<8x96xf32>
    %206 = vector.extract_strided_slice %205 {offsets = [0, 0], sizes = [8, 32], strides = [1, 1]} : vector<8x96xf32> to vector<8x32xf32>
    %207 = vector.extract_strided_slice %205 {offsets = [0, 32], sizes = [8, 32], strides = [1, 1]} : vector<8x96xf32> to vector<8x32xf32>
    %208 = vector.extract_strided_slice %205 {offsets = [0, 64], sizes = [8, 32], strides = [1, 1]} : vector<8x96xf32> to vector<8x32xf32>
    %209 = vector.extract_strided_slice %199 {offsets = [0, 96], sizes = [8, 32], strides = [1, 1]} : vector<8x128xf32> to vector<8x32xf32>
    %210 = math.tanh %209 : vector<8x32xf32>
    %211 = arith.mulf %207, %187 : vector<8x32xf32>
    %212 = arith.mulf %206, %210 : vector<8x32xf32>
    %213 = arith.addf %211, %212 : vector<8x32xf32>
    %214 = math.tanh %213 : vector<8x32xf32>
    %215 = arith.mulf %208, %214 : vector<8x32xf32>
    %216 = arith.index_cast %c7_i32 : i32 to index
    %c0_58 = arith.constant 0 : index
    %c0_59 = arith.constant 0 : index
    %217 = vector.load %arg18[%216, %c0_58, %c0_59] : memref<8x8x32xf32, #tpu.memory_space<vmem>>, vector<1x8x32xf32>
    %218 = vector.shape_cast %217 : vector<1x8x32xf32> to vector<8x32xf32>
    %219 = vector.shape_cast %215 : vector<8x32xf32> to vector<1x8x32xf32>
    tpu.vector_store %arg18[%216, %c0_58, %c0_59], %219 {strides = array<i32>} : memref<8x8x32xf32, #tpu.memory_space<vmem>>, vector<1x8x32xf32>,
    %c8_i32 = arith.constant 8 : i32
    %c0_60 = arith.constant 0 : index
    %c0_61 = arith.constant 0 : index
    %c0_62 = arith.constant 0 : index
    %220 = vector.load %arg18[%c0_60, %c0_61, %c0_62] : memref<8x8x32xf32, #tpu.memory_space<vmem>>, vector<8x8x32xf32>
    %221 = vector.shape_cast %220 : vector<8x8x32xf32> to vector<64x32xf32>
    %222 = arith.truncf %221 : vector<64x32xf32> to vector<64x32xbf16>
    %c0_63 = arith.constant 0 : index
    %c0_64 = arith.constant 0 : index
    %223 = vector.load %arg5[%c0_63, %c0_64] : memref<32x128xbf16, #tpu.memory_space<vmem>>, vector<32x128xbf16>
    %cst_65 = arith.constant dense<0.000000e+00> : vector<64x128xf32>
    %224 = tpu.matmul %222, %223, %cst_65 {dimension_numbers = #tpu.dot_dimension_numbers<[1], [0], [0], [1], [0, 0, 1, 1], [], []>} : vector<64x32xbf16>, vector<32x128xbf16>, vector<64x128xf32> -> vector<64x128xf32>
    %c0_66 = arith.constant 0 : index
    %c0_67 = arith.constant 0 : index
    %225 = vector.load %arg7[%c0_66, %c0_67] : memref<1x128xf32, #tpu.memory_space<vmem>>, vector<1x128xf32>
    %226 = vector.broadcast %225 : vector<1x128xf32> to vector<64x128xf32>
    %227 = arith.addf %224, %226 : vector<64x128xf32>
    %228 = vector.shape_cast %227 : vector<64x128xf32> to vector<8x8x128xf32>
    %c0_68 = arith.constant 0 : index
    %c0_69 = arith.constant 0 : index
    %c0_70 = arith.constant 0 : index
    %229 = vector.load %arg17[%c0_68, %c0_69, %c0_70] : memref<8x8x128xf32, #tpu.memory_space<vmem>>, vector<8x8x128xf32>
    tpu.vector_store %arg17[%c0_68, %c0_69, %c0_70], %228 {strides = array<i32>} : memref<8x8x128xf32, #tpu.memory_space<vmem>>, vector<8x8x128xf32>,
    %c0_71 = arith.constant 0 : index
    %c0_72 = arith.constant 0 : index
    %230 = vector.load %arg6[%c0_71, %c0_72] : memref<32x128xbf16, #tpu.memory_space<vmem>>, vector<32x128xbf16>
    %cst_73 = arith.constant 0.000000e+00 : f32
    %231 = vector.broadcast %cst_73 : f32 to vector<8x32xf32>
    %c0_i32_74 = arith.constant 0 : i32
    %232 = arith.index_cast %c0_i32_74 : i32 to index
    %c0_75 = arith.constant 0 : index
    %c0_76 = arith.constant 0 : index
    %233 = vector.load %arg17[%232, %c0_75, %c0_76] : memref<8x8x128xf32, #tpu.memory_space<vmem>>, vector<1x8x128xf32>
    %234 = vector.shape_cast %233 : vector<1x8x128xf32> to vector<8x128xf32>
    %235 = arith.truncf %231 : vector<8x32xf32> to vector<8x32xbf16>
    %cst_77 = arith.constant dense<0.000000e+00> : vector<8x128xf32>
    %236 = tpu.matmul %235, %230, %cst_77 {dimension_numbers = #tpu.dot_dimension_numbers<[1], [0], [0], [1], [0, 0, 1, 1], [], []>} : vector<8x32xbf16>, vector<32x128xbf16>, vector<8x128xf32> -> vector<8x128xf32>
    %237 = arith.addf %234, %236 : vector<8x128xf32>
    %238 = vector.extract_strided_slice %237 {offsets = [0, 0], sizes = [8, 96], strides = [1, 1]} : vector<8x128xf32> to vector<8x96xf32>
    %239 = arith.negf %238 : vector<8x96xf32>
    %240 = math.exp %239 : vector<8x96xf32>
    %cst_78 = arith.constant 1.000000e+00 : f32
    %241 = vector.broadcast %cst_78 : f32 to vector<8x96xf32>
    %242 = arith.addf %241, %240 : vector<8x96xf32>
    %243 = arith.divf %241, %242 : vector<8x96xf32>
    %244 = vector.extract_strided_slice %243 {offsets = [0, 0], sizes = [8, 32], strides = [1, 1]} : vector<8x96xf32> to vector<8x32xf32>
    %245 = vector.extract_strided_slice %243 {offsets = [0, 32], sizes = [8, 32], strides = [1, 1]} : vector<8x96xf32> to vector<8x32xf32>
    %246 = vector.extract_strided_slice %243 {offsets = [0, 64], sizes = [8, 32], strides = [1, 1]} : vector<8x96xf32> to vector<8x32xf32>
    %247 = vector.extract_strided_slice %237 {offsets = [0, 96], sizes = [8, 32], strides = [1, 1]} : vector<8x128xf32> to vector<8x32xf32>
    %248 = math.tanh %247 : vector<8x32xf32>
    %249 = arith.mulf %245, %231 : vector<8x32xf32>
    %250 = arith.mulf %244, %248 : vector<8x32xf32>
    %251 = arith.addf %249, %250 : vector<8x32xf32>
    %252 = math.tanh %251 : vector<8x32xf32>
    %253 = arith.mulf %246, %252 : vector<8x32xf32>
    %254 = arith.index_cast %c0_i32_74 : i32 to index
    %c0_79 = arith.constant 0 : index
    %c0_80 = arith.constant 0 : index
    %255 = vector.load %arg18[%254, %c0_79, %c0_80] : memref<8x8x32xf32, #tpu.memory_space<vmem>>, vector<1x8x32xf32>
    %256 = vector.shape_cast %255 : vector<1x8x32xf32> to vector<8x32xf32>
    %257 = vector.shape_cast %253 : vector<8x32xf32> to vector<1x8x32xf32>
    tpu.vector_store %arg18[%254, %c0_79, %c0_80], %257 {strides = array<i32>} : memref<8x8x32xf32, #tpu.memory_space<vmem>>, vector<1x8x32xf32>,
    %c1_i32_81 = arith.constant 1 : i32
    %258 = arith.index_cast %c1_i32_81 : i32 to index
    %c0_82 = arith.constant 0 : index
    %c0_83 = arith.constant 0 : index
    %259 = vector.load %arg17[%258, %c0_82, %c0_83] : memref<8x8x128xf32, #tpu.memory_space<vmem>>, vector<1x8x128xf32>
    %260 = vector.shape_cast %259 : vector<1x8x128xf32> to vector<8x128xf32>
    %261 = arith.truncf %253 : vector<8x32xf32> to vector<8x32xbf16>
    %cst_84 = arith.constant dense<0.000000e+00> : vector<8x128xf32>
    %262 = tpu.matmul %261, %230, %cst_84 {dimension_numbers = #tpu.dot_dimension_numbers<[1], [0], [0], [1], [0, 0, 1, 1], [], []>} : vector<8x32xbf16>, vector<32x128xbf16>, vector<8x128xf32> -> vector<8x128xf32>
    %263 = arith.addf %260, %262 : vector<8x128xf32>
    %264 = vector.extract_strided_slice %263 {offsets = [0, 0], sizes = [8, 96], strides = [1, 1]} : vector<8x128xf32> to vector<8x96xf32>
    %265 = arith.negf %264 : vector<8x96xf32>
    %266 = math.exp %265 : vector<8x96xf32>
    %cst_85 = arith.constant 1.000000e+00 : f32
    %267 = vector.broadcast %cst_85 : f32 to vector<8x96xf32>
    %268 = arith.addf %267, %266 : vector<8x96xf32>
    %269 = arith.divf %267, %268 : vector<8x96xf32>
    %270 = vector.extract_strided_slice %269 {offsets = [0, 0], sizes = [8, 32], strides = [1, 1]} : vector<8x96xf32> to vector<8x32xf32>
    %271 = vector.extract_strided_slice %269 {offsets = [0, 32], sizes = [8, 32], strides = [1, 1]} : vector<8x96xf32> to vector<8x32xf32>
    %272 = vector.extract_strided_slice %269 {offsets = [0, 64], sizes = [8, 32], strides = [1, 1]} : vector<8x96xf32> to vector<8x32xf32>
    %273 = vector.extract_strided_slice %263 {offsets = [0, 96], sizes = [8, 32], strides = [1, 1]} : vector<8x128xf32> to vector<8x32xf32>
    %274 = math.tanh %273 : vector<8x32xf32>
    %275 = arith.mulf %271, %251 : vector<8x32xf32>
    %276 = arith.mulf %270, %274 : vector<8x32xf32>
    %277 = arith.addf %275, %276 : vector<8x32xf32>
    %278 = math.tanh %277 : vector<8x32xf32>
    %279 = arith.mulf %272, %278 : vector<8x32xf32>
    %280 = arith.index_cast %c1_i32_81 : i32 to index
    %c0_86 = arith.constant 0 : index
    %c0_87 = arith.constant 0 : index
    %281 = vector.load %arg18[%280, %c0_86, %c0_87] : memref<8x8x32xf32, #tpu.memory_space<vmem>>, vector<1x8x32xf32>
    %282 = vector.shape_cast %281 : vector<1x8x32xf32> to vector<8x32xf32>
    %283 = vector.shape_cast %279 : vector<8x32xf32> to vector<1x8x32xf32>
    tpu.vector_store %arg18[%280, %c0_86, %c0_87], %283 {strides = array<i32>} : memref<8x8x32xf32, #tpu.memory_space<vmem>>, vector<1x8x32xf32>,
    %c2_i32_88 = arith.constant 2 : i32
    %284 = arith.index_cast %c2_i32_88 : i32 to index
    %c0_89 = arith.constant 0 : index
    %c0_90 = arith.constant 0 : index
    %285 = vector.load %arg17[%284, %c0_89, %c0_90] : memref<8x8x128xf32, #tpu.memory_space<vmem>>, vector<1x8x128xf32>
    %286 = vector.shape_cast %285 : vector<1x8x128xf32> to vector<8x128xf32>
    %287 = arith.truncf %279 : vector<8x32xf32> to vector<8x32xbf16>
    %cst_91 = arith.constant dense<0.000000e+00> : vector<8x128xf32>
    %288 = tpu.matmul %287, %230, %cst_91 {dimension_numbers = #tpu.dot_dimension_numbers<[1], [0], [0], [1], [0, 0, 1, 1], [], []>} : vector<8x32xbf16>, vector<32x128xbf16>, vector<8x128xf32> -> vector<8x128xf32>
    %289 = arith.addf %286, %288 : vector<8x128xf32>
    %290 = vector.extract_strided_slice %289 {offsets = [0, 0], sizes = [8, 96], strides = [1, 1]} : vector<8x128xf32> to vector<8x96xf32>
    %291 = arith.negf %290 : vector<8x96xf32>
    %292 = math.exp %291 : vector<8x96xf32>
    %cst_92 = arith.constant 1.000000e+00 : f32
    %293 = vector.broadcast %cst_92 : f32 to vector<8x96xf32>
    %294 = arith.addf %293, %292 : vector<8x96xf32>
    %295 = arith.divf %293, %294 : vector<8x96xf32>
    %296 = vector.extract_strided_slice %295 {offsets = [0, 0], sizes = [8, 32], strides = [1, 1]} : vector<8x96xf32> to vector<8x32xf32>
    %297 = vector.extract_strided_slice %295 {offsets = [0, 32], sizes = [8, 32], strides = [1, 1]} : vector<8x96xf32> to vector<8x32xf32>
    %298 = vector.extract_strided_slice %295 {offsets = [0, 64], sizes = [8, 32], strides = [1, 1]} : vector<8x96xf32> to vector<8x32xf32>
    %299 = vector.extract_strided_slice %289 {offsets = [0, 96], sizes = [8, 32], strides = [1, 1]} : vector<8x128xf32> to vector<8x32xf32>
    %300 = math.tanh %299 : vector<8x32xf32>
    %301 = arith.mulf %297, %277 : vector<8x32xf32>
    %302 = arith.mulf %296, %300 : vector<8x32xf32>
    %303 = arith.addf %301, %302 : vector<8x32xf32>
    %304 = math.tanh %303 : vector<8x32xf32>
    %305 = arith.mulf %298, %304 : vector<8x32xf32>
    %306 = arith.index_cast %c2_i32_88 : i32 to index
    %c0_93 = arith.constant 0 : index
    %c0_94 = arith.constant 0 : index
    %307 = vector.load %arg18[%306, %c0_93, %c0_94] : memref<8x8x32xf32, #tpu.memory_space<vmem>>, vector<1x8x32xf32>
    %308 = vector.shape_cast %307 : vector<1x8x32xf32> to vector<8x32xf32>
    %309 = vector.shape_cast %305 : vector<8x32xf32> to vector<1x8x32xf32>
    tpu.vector_store %arg18[%306, %c0_93, %c0_94], %309 {strides = array<i32>} : memref<8x8x32xf32, #tpu.memory_space<vmem>>, vector<1x8x32xf32>,
    %c3_i32_95 = arith.constant 3 : i32
    %310 = arith.index_cast %c3_i32_95 : i32 to index
    %c0_96 = arith.constant 0 : index
    %c0_97 = arith.constant 0 : index
    %311 = vector.load %arg17[%310, %c0_96, %c0_97] : memref<8x8x128xf32, #tpu.memory_space<vmem>>, vector<1x8x128xf32>
    %312 = vector.shape_cast %311 : vector<1x8x128xf32> to vector<8x128xf32>
    %313 = arith.truncf %305 : vector<8x32xf32> to vector<8x32xbf16>
    %cst_98 = arith.constant dense<0.000000e+00> : vector<8x128xf32>
    %314 = tpu.matmul %313, %230, %cst_98 {dimension_numbers = #tpu.dot_dimension_numbers<[1], [0], [0], [1], [0, 0, 1, 1], [], []>} : vector<8x32xbf16>, vector<32x128xbf16>, vector<8x128xf32> -> vector<8x128xf32>
    %315 = arith.addf %312, %314 : vector<8x128xf32>
    %316 = vector.extract_strided_slice %315 {offsets = [0, 0], sizes = [8, 96], strides = [1, 1]} : vector<8x128xf32> to vector<8x96xf32>
    %317 = arith.negf %316 : vector<8x96xf32>
    %318 = math.exp %317 : vector<8x96xf32>
    %cst_99 = arith.constant 1.000000e+00 : f32
    %319 = vector.broadcast %cst_99 : f32 to vector<8x96xf32>
    %320 = arith.addf %319, %318 : vector<8x96xf32>
    %321 = arith.divf %319, %320 : vector<8x96xf32>
    %322 = vector.extract_strided_slice %321 {offsets = [0, 0], sizes = [8, 32], strides = [1, 1]} : vector<8x96xf32> to vector<8x32xf32>
    %323 = vector.extract_strided_slice %321 {offsets = [0, 32], sizes = [8, 32], strides = [1, 1]} : vector<8x96xf32> to vector<8x32xf32>
    %324 = vector.extract_strided_slice %321 {offsets = [0, 64], sizes = [8, 32], strides = [1, 1]} : vector<8x96xf32> to vector<8x32xf32>
    %325 = vector.extract_strided_slice %315 {offsets = [0, 96], sizes = [8, 32], strides = [1, 1]} : vector<8x128xf32> to vector<8x32xf32>
    %326 = math.tanh %325 : vector<8x32xf32>
    %327 = arith.mulf %323, %303 : vector<8x32xf32>
    %328 = arith.mulf %322, %326 : vector<8x32xf32>
    %329 = arith.addf %327, %328 : vector<8x32xf32>
    %330 = math.tanh %329 : vector<8x32xf32>
    %331 = arith.mulf %324, %330 : vector<8x32xf32>
    %332 = arith.index_cast %c3_i32_95 : i32 to index
    %c0_100 = arith.constant 0 : index
    %c0_101 = arith.constant 0 : index
    %333 = vector.load %arg18[%332, %c0_100, %c0_101] : memref<8x8x32xf32, #tpu.memory_space<vmem>>, vector<1x8x32xf32>
    %334 = vector.shape_cast %333 : vector<1x8x32xf32> to vector<8x32xf32>
    %335 = vector.shape_cast %331 : vector<8x32xf32> to vector<1x8x32xf32>
    tpu.vector_store %arg18[%332, %c0_100, %c0_101], %335 {strides = array<i32>} : memref<8x8x32xf32, #tpu.memory_space<vmem>>, vector<1x8x32xf32>,
    %c4_i32_102 = arith.constant 4 : i32
    %336 = arith.index_cast %c4_i32_102 : i32 to index
    %c0_103 = arith.constant 0 : index
    %c0_104 = arith.constant 0 : index
    %337 = vector.load %arg17[%336, %c0_103, %c0_104] : memref<8x8x128xf32, #tpu.memory_space<vmem>>, vector<1x8x128xf32>
    %338 = vector.shape_cast %337 : vector<1x8x128xf32> to vector<8x128xf32>
    %339 = arith.truncf %331 : vector<8x32xf32> to vector<8x32xbf16>
    %cst_105 = arith.constant dense<0.000000e+00> : vector<8x128xf32>
    %340 = tpu.matmul %339, %230, %cst_105 {dimension_numbers = #tpu.dot_dimension_numbers<[1], [0], [0], [1], [0, 0, 1, 1], [], []>} : vector<8x32xbf16>, vector<32x128xbf16>, vector<8x128xf32> -> vector<8x128xf32>
    %341 = arith.addf %338, %340 : vector<8x128xf32>
    %342 = vector.extract_strided_slice %341 {offsets = [0, 0], sizes = [8, 96], strides = [1, 1]} : vector<8x128xf32> to vector<8x96xf32>
    %343 = arith.negf %342 : vector<8x96xf32>
    %344 = math.exp %343 : vector<8x96xf32>
    %cst_106 = arith.constant 1.000000e+00 : f32
    %345 = vector.broadcast %cst_106 : f32 to vector<8x96xf32>
    %346 = arith.addf %345, %344 : vector<8x96xf32>
    %347 = arith.divf %345, %346 : vector<8x96xf32>
    %348 = vector.extract_strided_slice %347 {offsets = [0, 0], sizes = [8, 32], strides = [1, 1]} : vector<8x96xf32> to vector<8x32xf32>
    %349 = vector.extract_strided_slice %347 {offsets = [0, 32], sizes = [8, 32], strides = [1, 1]} : vector<8x96xf32> to vector<8x32xf32>
    %350 = vector.extract_strided_slice %347 {offsets = [0, 64], sizes = [8, 32], strides = [1, 1]} : vector<8x96xf32> to vector<8x32xf32>
    %351 = vector.extract_strided_slice %341 {offsets = [0, 96], sizes = [8, 32], strides = [1, 1]} : vector<8x128xf32> to vector<8x32xf32>
    %352 = math.tanh %351 : vector<8x32xf32>
    %353 = arith.mulf %349, %329 : vector<8x32xf32>
    %354 = arith.mulf %348, %352 : vector<8x32xf32>
    %355 = arith.addf %353, %354 : vector<8x32xf32>
    %356 = math.tanh %355 : vector<8x32xf32>
    %357 = arith.mulf %350, %356 : vector<8x32xf32>
    %358 = arith.index_cast %c4_i32_102 : i32 to index
    %c0_107 = arith.constant 0 : index
    %c0_108 = arith.constant 0 : index
    %359 = vector.load %arg18[%358, %c0_107, %c0_108] : memref<8x8x32xf32, #tpu.memory_space<vmem>>, vector<1x8x32xf32>
    %360 = vector.shape_cast %359 : vector<1x8x32xf32> to vector<8x32xf32>
    %361 = vector.shape_cast %357 : vector<8x32xf32> to vector<1x8x32xf32>
    tpu.vector_store %arg18[%358, %c0_107, %c0_108], %361 {strides = array<i32>} : memref<8x8x32xf32, #tpu.memory_space<vmem>>, vector<1x8x32xf32>,
    %c5_i32_109 = arith.constant 5 : i32
    %362 = arith.index_cast %c5_i32_109 : i32 to index
    %c0_110 = arith.constant 0 : index
    %c0_111 = arith.constant 0 : index
    %363 = vector.load %arg17[%362, %c0_110, %c0_111] : memref<8x8x128xf32, #tpu.memory_space<vmem>>, vector<1x8x128xf32>
    %364 = vector.shape_cast %363 : vector<1x8x128xf32> to vector<8x128xf32>
    %365 = arith.truncf %357 : vector<8x32xf32> to vector<8x32xbf16>
    %cst_112 = arith.constant dense<0.000000e+00> : vector<8x128xf32>
    %366 = tpu.matmul %365, %230, %cst_112 {dimension_numbers = #tpu.dot_dimension_numbers<[1], [0], [0], [1], [0, 0, 1, 1], [], []>} : vector<8x32xbf16>, vector<32x128xbf16>, vector<8x128xf32> -> vector<8x128xf32>
    %367 = arith.addf %364, %366 : vector<8x128xf32>
    %368 = vector.extract_strided_slice %367 {offsets = [0, 0], sizes = [8, 96], strides = [1, 1]} : vector<8x128xf32> to vector<8x96xf32>
    %369 = arith.negf %368 : vector<8x96xf32>
    %370 = math.exp %369 : vector<8x96xf32>
    %cst_113 = arith.constant 1.000000e+00 : f32
    %371 = vector.broadcast %cst_113 : f32 to vector<8x96xf32>
    %372 = arith.addf %371, %370 : vector<8x96xf32>
    %373 = arith.divf %371, %372 : vector<8x96xf32>
    %374 = vector.extract_strided_slice %373 {offsets = [0, 0], sizes = [8, 32], strides = [1, 1]} : vector<8x96xf32> to vector<8x32xf32>
    %375 = vector.extract_strided_slice %373 {offsets = [0, 32], sizes = [8, 32], strides = [1, 1]} : vector<8x96xf32> to vector<8x32xf32>
    %376 = vector.extract_strided_slice %373 {offsets = [0, 64], sizes = [8, 32], strides = [1, 1]} : vector<8x96xf32> to vector<8x32xf32>
    %377 = vector.extract_strided_slice %367 {offsets = [0, 96], sizes = [8, 32], strides = [1, 1]} : vector<8x128xf32> to vector<8x32xf32>
    %378 = math.tanh %377 : vector<8x32xf32>
    %379 = arith.mulf %375, %355 : vector<8x32xf32>
    %380 = arith.mulf %374, %378 : vector<8x32xf32>
    %381 = arith.addf %379, %380 : vector<8x32xf32>
    %382 = math.tanh %381 : vector<8x32xf32>
    %383 = arith.mulf %376, %382 : vector<8x32xf32>
    %384 = arith.index_cast %c5_i32_109 : i32 to index
    %c0_114 = arith.constant 0 : index
    %c0_115 = arith.constant 0 : index
    %385 = vector.load %arg18[%384, %c0_114, %c0_115] : memref<8x8x32xf32, #tpu.memory_space<vmem>>, vector<1x8x32xf32>
    %386 = vector.shape_cast %385 : vector<1x8x32xf32> to vector<8x32xf32>
    %387 = vector.shape_cast %383 : vector<8x32xf32> to vector<1x8x32xf32>
    tpu.vector_store %arg18[%384, %c0_114, %c0_115], %387 {strides = array<i32>} : memref<8x8x32xf32, #tpu.memory_space<vmem>>, vector<1x8x32xf32>,
    %c6_i32_116 = arith.constant 6 : i32
    %388 = arith.index_cast %c6_i32_116 : i32 to index
    %c0_117 = arith.constant 0 : index
    %c0_118 = arith.constant 0 : index
    %389 = vector.load %arg17[%388, %c0_117, %c0_118] : memref<8x8x128xf32, #tpu.memory_space<vmem>>, vector<1x8x128xf32>
    %390 = vector.shape_cast %389 : vector<1x8x128xf32> to vector<8x128xf32>
    %391 = arith.truncf %383 : vector<8x32xf32> to vector<8x32xbf16>
    %cst_119 = arith.constant dense<0.000000e+00> : vector<8x128xf32>
    %392 = tpu.matmul %391, %230, %cst_119 {dimension_numbers = #tpu.dot_dimension_numbers<[1], [0], [0], [1], [0, 0, 1, 1], [], []>} : vector<8x32xbf16>, vector<32x128xbf16>, vector<8x128xf32> -> vector<8x128xf32>
    %393 = arith.addf %390, %392 : vector<8x128xf32>
    %394 = vector.extract_strided_slice %393 {offsets = [0, 0], sizes = [8, 96], strides = [1, 1]} : vector<8x128xf32> to vector<8x96xf32>
    %395 = arith.negf %394 : vector<8x96xf32>
    %396 = math.exp %395 : vector<8x96xf32>
    %cst_120 = arith.constant 1.000000e+00 : f32
    %397 = vector.broadcast %cst_120 : f32 to vector<8x96xf32>
    %398 = arith.addf %397, %396 : vector<8x96xf32>
    %399 = arith.divf %397, %398 : vector<8x96xf32>
    %400 = vector.extract_strided_slice %399 {offsets = [0, 0], sizes = [8, 32], strides = [1, 1]} : vector<8x96xf32> to vector<8x32xf32>
    %401 = vector.extract_strided_slice %399 {offsets = [0, 32], sizes = [8, 32], strides = [1, 1]} : vector<8x96xf32> to vector<8x32xf32>
    %402 = vector.extract_strided_slice %399 {offsets = [0, 64], sizes = [8, 32], strides = [1, 1]} : vector<8x96xf32> to vector<8x32xf32>
    %403 = vector.extract_strided_slice %393 {offsets = [0, 96], sizes = [8, 32], strides = [1, 1]} : vector<8x128xf32> to vector<8x32xf32>
    %404 = math.tanh %403 : vector<8x32xf32>
    %405 = arith.mulf %401, %381 : vector<8x32xf32>
    %406 = arith.mulf %400, %404 : vector<8x32xf32>
    %407 = arith.addf %405, %406 : vector<8x32xf32>
    %408 = math.tanh %407 : vector<8x32xf32>
    %409 = arith.mulf %402, %408 : vector<8x32xf32>
    %410 = arith.index_cast %c6_i32_116 : i32 to index
    %c0_121 = arith.constant 0 : index
    %c0_122 = arith.constant 0 : index
    %411 = vector.load %arg18[%410, %c0_121, %c0_122] : memref<8x8x32xf32, #tpu.memory_space<vmem>>, vector<1x8x32xf32>
    %412 = vector.shape_cast %411 : vector<1x8x32xf32> to vector<8x32xf32>
    %413 = vector.shape_cast %409 : vector<8x32xf32> to vector<1x8x32xf32>
    tpu.vector_store %arg18[%410, %c0_121, %c0_122], %413 {strides = array<i32>} : memref<8x8x32xf32, #tpu.memory_space<vmem>>, vector<1x8x32xf32>,
    %c7_i32_123 = arith.constant 7 : i32
    %414 = arith.index_cast %c7_i32_123 : i32 to index
    %c0_124 = arith.constant 0 : index
    %c0_125 = arith.constant 0 : index
    %415 = vector.load %arg17[%414, %c0_124, %c0_125] : memref<8x8x128xf32, #tpu.memory_space<vmem>>, vector<1x8x128xf32>
    %416 = vector.shape_cast %415 : vector<1x8x128xf32> to vector<8x128xf32>
    %417 = arith.truncf %409 : vector<8x32xf32> to vector<8x32xbf16>
    %cst_126 = arith.constant dense<0.000000e+00> : vector<8x128xf32>
    %418 = tpu.matmul %417, %230, %cst_126 {dimension_numbers = #tpu.dot_dimension_numbers<[1], [0], [0], [1], [0, 0, 1, 1], [], []>} : vector<8x32xbf16>, vector<32x128xbf16>, vector<8x128xf32> -> vector<8x128xf32>
    %419 = arith.addf %416, %418 : vector<8x128xf32>
    %420 = vector.extract_strided_slice %419 {offsets = [0, 0], sizes = [8, 96], strides = [1, 1]} : vector<8x128xf32> to vector<8x96xf32>
    %421 = arith.negf %420 : vector<8x96xf32>
    %422 = math.exp %421 : vector<8x96xf32>
    %cst_127 = arith.constant 1.000000e+00 : f32
    %423 = vector.broadcast %cst_127 : f32 to vector<8x96xf32>
    %424 = arith.addf %423, %422 : vector<8x96xf32>
    %425 = arith.divf %423, %424 : vector<8x96xf32>
    %426 = vector.extract_strided_slice %425 {offsets = [0, 0], sizes = [8, 32], strides = [1, 1]} : vector<8x96xf32> to vector<8x32xf32>
    %427 = vector.extract_strided_slice %425 {offsets = [0, 32], sizes = [8, 32], strides = [1, 1]} : vector<8x96xf32> to vector<8x32xf32>
    %428 = vector.extract_strided_slice %425 {offsets = [0, 64], sizes = [8, 32], strides = [1, 1]} : vector<8x96xf32> to vector<8x32xf32>
    %429 = vector.extract_strided_slice %419 {offsets = [0, 96], sizes = [8, 32], strides = [1, 1]} : vector<8x128xf32> to vector<8x32xf32>
    %430 = math.tanh %429 : vector<8x32xf32>
    %431 = arith.mulf %427, %407 : vector<8x32xf32>
    %432 = arith.mulf %426, %430 : vector<8x32xf32>
    %433 = arith.addf %431, %432 : vector<8x32xf32>
    %434 = math.tanh %433 : vector<8x32xf32>
    %435 = arith.mulf %428, %434 : vector<8x32xf32>
    %436 = arith.index_cast %c7_i32_123 : i32 to index
    %c0_128 = arith.constant 0 : index
    %c0_129 = arith.constant 0 : index
    %437 = vector.load %arg18[%436, %c0_128, %c0_129] : memref<8x8x32xf32, #tpu.memory_space<vmem>>, vector<1x8x32xf32>
    %438 = vector.shape_cast %437 : vector<1x8x32xf32> to vector<8x32xf32>
    %439 = vector.shape_cast %435 : vector<8x32xf32> to vector<1x8x32xf32>
    tpu.vector_store %arg18[%436, %c0_128, %c0_129], %439 {strides = array<i32>} : memref<8x8x32xf32, #tpu.memory_space<vmem>>, vector<1x8x32xf32>,
    %c8_i32_130 = arith.constant 8 : i32
    %c0_131 = arith.constant 0 : index
    %c0_132 = arith.constant 0 : index
    %c0_133 = arith.constant 0 : index
    %440 = vector.load %arg18[%c0_131, %c0_132, %c0_133] : memref<8x8x32xf32, #tpu.memory_space<vmem>>, vector<8x8x32xf32>
    %441 = vector.shape_cast %440 : vector<8x8x32xf32> to vector<64x32xf32>
    %cst_134 = arith.constant dense<0.000000e+00> : vector<64xf32>
    %442 = vector.multi_reduction <add>, %441, %cst_134 [1] : vector<64x32xf32> to vector<64xf32>
    %443 = vector.shape_cast %442 : vector<64xf32> to vector<64x1xf32>
    %cst_135 = arith.constant 3.200000e+01 : f32
    %444 = vector.broadcast %cst_135 : f32 to vector<64x1xf32>
    %445 = arith.divf %443, %444 : vector<64x1xf32>
    %446 = vector.broadcast %445 : vector<64x1xf32> to vector<64x32xf32>
    %447 = arith.subf %441, %446 : vector<64x32xf32>
    %448 = arith.mulf %447, %447 : vector<64x32xf32>
    %cst_136 = arith.constant dense<0.000000e+00> : vector<64xf32>
    %449 = vector.multi_reduction <add>, %448, %cst_136 [1] : vector<64x32xf32> to vector<64xf32>
    %450 = vector.shape_cast %449 : vector<64xf32> to vector<64x1xf32>
    %cst_137 = arith.constant 3.200000e+01 : f32
    %451 = vector.broadcast %cst_137 : f32 to vector<64x1xf32>
    %452 = arith.divf %450, %451 : vector<64x1xf32>
    %453 = vector.broadcast %445 : vector<64x1xf32> to vector<64x32xf32>
    %454 = arith.subf %441, %453 : vector<64x32xf32>
    %cst_138 = arith.constant 9.99999974E-6 : f32
    %455 = vector.broadcast %cst_138 : f32 to vector<64x1xf32>
    %456 = arith.addf %452, %455 : vector<64x1xf32>
    %457 = math.rsqrt %456 : vector<64x1xf32>
    %458 = vector.broadcast %457 : vector<64x1xf32> to vector<64x32xf32>
    %459 = arith.mulf %454, %458 : vector<64x32xf32>
    %c0_139 = arith.constant 0 : index
    %c0_140 = arith.constant 0 : index
    %460 = vector.load %arg8[%c0_139, %c0_140] : memref<1x32xf32, #tpu.memory_space<vmem>>, vector<1x32xf32>
    %461 = vector.broadcast %460 : vector<1x32xf32> to vector<64x32xf32>
    %462 = arith.mulf %459, %461 : vector<64x32xf32>
    %c0_141 = arith.constant 0 : index
    %c0_142 = arith.constant 0 : index
    %463 = vector.load %arg9[%c0_141, %c0_142] : memref<1x32xf32, #tpu.memory_space<vmem>>, vector<1x32xf32>
    %464 = vector.broadcast %463 : vector<1x32xf32> to vector<64x32xf32>
    %465 = arith.addf %462, %464 : vector<64x32xf32>
    %466 = arith.truncf %465 : vector<64x32xf32> to vector<64x32xbf16>
    %c0_143 = arith.constant 0 : index
    %c0_144 = arith.constant 0 : index
    %467 = vector.load %arg10[%c0_143, %c0_144] : memref<32x256xbf16, #tpu.memory_space<vmem>>, vector<32x256xbf16>
    %cst_145 = arith.constant dense<0.000000e+00> : vector<64x256xf32>
    %468 = tpu.matmul %466, %467, %cst_145 {dimension_numbers = #tpu.dot_dimension_numbers<[1], [0], [0], [1], [0, 0, 1, 1], [], []>} : vector<64x32xbf16>, vector<32x256xbf16>, vector<64x256xf32> -> vector<64x256xf32>
    %c0_146 = arith.constant 0 : index
    %c0_147 = arith.constant 0 : index
    %469 = vector.load %arg11[%c0_146, %c0_147] : memref<1x256xf32, #tpu.memory_space<vmem>>, vector<1x256xf32>
    %470 = vector.broadcast %469 : vector<1x256xf32> to vector<64x256xf32>
    %471 = arith.addf %468, %470 : vector<64x256xf32>
    %cst_148 = arith.constant 0.000000e+00 : f32
    %472 = vector.broadcast %cst_148 : f32 to vector<64x256xf32>
    %473 = arith.maximumf %471, %472 : vector<64x256xf32>
    %474 = arith.truncf %473 : vector<64x256xf32> to vector<64x256xbf16>
    %c0_149 = arith.constant 0 : index
    %c0_150 = arith.constant 0 : index
    %475 = vector.load %arg12[%c0_149, %c0_150] : memref<256x64xbf16, #tpu.memory_space<vmem>>, vector<256x64xbf16>
    %cst_151 = arith.constant dense<0.000000e+00> : vector<64x64xf32>
    %476 = tpu.matmul %474, %475, %cst_151 {dimension_numbers = #tpu.dot_dimension_numbers<[1], [0], [0], [1], [0, 0, 1, 1], [], []>} : vector<64x256xbf16>, vector<256x64xbf16>, vector<64x64xf32> -> vector<64x64xf32>
    %c0_152 = arith.constant 0 : index
    %c0_153 = arith.constant 0 : index
    %477 = vector.load %arg13[%c0_152, %c0_153] : memref<1x64xf32, #tpu.memory_space<vmem>>, vector<1x64xf32>
    %478 = vector.broadcast %477 : vector<1x64xf32> to vector<64x64xf32>
    %479 = arith.addf %476, %478 : vector<64x64xf32>
    %c0_154 = arith.constant 0 : index
    %c0_155 = arith.constant 0 : index
    %c0_156 = arith.constant 0 : index
    %480 = vector.load %arg1[%c0_154, %c0_155, %c0_156] : memref<8x8x64xf32, #tpu.memory_space<vmem>>, vector<8x8x64xf32>
    %481 = vector.shape_cast %480 : vector<8x8x64xf32> to vector<64x64xf32>
    %482 = arith.addf %481, %479 : vector<64x64xf32>
    %cst_157 = arith.constant dense<0.000000e+00> : vector<64xf32>
    %483 = vector.multi_reduction <add>, %482, %cst_157 [1] : vector<64x64xf32> to vector<64xf32>
    %484 = vector.shape_cast %483 : vector<64xf32> to vector<64x1xf32>
    %cst_158 = arith.constant 6.400000e+01 : f32
    %485 = vector.broadcast %cst_158 : f32 to vector<64x1xf32>
    %486 = arith.divf %484, %485 : vector<64x1xf32>
    %487 = vector.broadcast %486 : vector<64x1xf32> to vector<64x64xf32>
    %488 = arith.subf %482, %487 : vector<64x64xf32>
    %489 = arith.mulf %488, %488 : vector<64x64xf32>
    %cst_159 = arith.constant dense<0.000000e+00> : vector<64xf32>
    %490 = vector.multi_reduction <add>, %489, %cst_159 [1] : vector<64x64xf32> to vector<64xf32>
    %491 = vector.shape_cast %490 : vector<64xf32> to vector<64x1xf32>
    %cst_160 = arith.constant 6.400000e+01 : f32
    %492 = vector.broadcast %cst_160 : f32 to vector<64x1xf32>
    %493 = arith.divf %491, %492 : vector<64x1xf32>
    %494 = vector.broadcast %486 : vector<64x1xf32> to vector<64x64xf32>
    %495 = arith.subf %482, %494 : vector<64x64xf32>
    %cst_161 = arith.constant 9.99999974E-6 : f32
    %496 = vector.broadcast %cst_161 : f32 to vector<64x1xf32>
    %497 = arith.addf %493, %496 : vector<64x1xf32>
    %498 = math.rsqrt %497 : vector<64x1xf32>
    %499 = vector.broadcast %498 : vector<64x1xf32> to vector<64x64xf32>
    %500 = arith.mulf %495, %499 : vector<64x64xf32>
    %c0_162 = arith.constant 0 : index
    %c0_163 = arith.constant 0 : index
    %501 = vector.load %arg14[%c0_162, %c0_163] : memref<1x64xf32, #tpu.memory_space<vmem>>, vector<1x64xf32>
    %502 = vector.broadcast %501 : vector<1x64xf32> to vector<64x64xf32>
    %503 = arith.mulf %500, %502 : vector<64x64xf32>
    %c0_164 = arith.constant 0 : index
    %c0_165 = arith.constant 0 : index
    %504 = vector.load %arg15[%c0_164, %c0_165] : memref<1x64xf32, #tpu.memory_space<vmem>>, vector<1x64xf32>
    %505 = vector.broadcast %504 : vector<1x64xf32> to vector<64x64xf32>
    %506 = arith.addf %503, %505 : vector<64x64xf32>
    %507 = vector.shape_cast %506 : vector<64x64xf32> to vector<8x8x64xf32>
    %c0_166 = arith.constant 0 : index
    %c0_167 = arith.constant 0 : index
    %c0_168 = arith.constant 0 : index
    %508 = vector.load %arg16[%c0_166, %c0_167, %c0_168] : memref<8x8x64xf32, #tpu.memory_space<vmem>>, vector<8x8x64xf32>
    tpu.vector_store %arg16[%c0_166, %c0_167, %c0_168], %507 {strides = array<i32>} : memref<8x8x64xf32, #tpu.memory_space<vmem>>, vector<8x8x64xf32>,
    return
  }
  func.func @transform_0(%arg0: i32) -> (i32, i32, i32) {
    %c0_i32 = arith.constant 0 : i32
    %c0_i32_0 = arith.constant 0 : i32
    %c0_i32_1 = arith.constant 0 : i32
    return %arg0, %c0_i32, %c0_i32_0 : i32, i32, i32
  }
  func.func @transform_1(%arg0: i32) -> (i32, i32) {
    %c0_i32 = arith.constant 0 : i32
    %c0_i32_0 = arith.constant 0 : i32
    %c0_i32_1 = arith.constant 0 : i32
    return %c0_i32, %c0_i32_0 : i32, i32
  }
  func.func @transform_2(%arg0: i32) -> (i32, i32) {
    %c0_i32 = arith.constant 0 : i32
    %c0_i32_0 = arith.constant 0 : i32
    %c0_i32_1 = arith.constant 0 : i32
    return %c0_i32, %c0_i32_0 : i32, i32
  }
  func.func @transform_3(%arg0: i32) -> (i32, i32) {
    %c0_i32 = arith.constant 0 : i32
    %c0_i32_0 = arith.constant 0 : i32
    %c0_i32_1 = arith.constant 0 : i32
    return %c0_i32, %c0_i32_0 : i32, i32
  }
  func.func @transform_4(%arg0: i32) -> (i32, i32) {
    %c0_i32 = arith.constant 0 : i32
    %c0_i32_0 = arith.constant 0 : i32
    %c0_i32_1 = arith.constant 0 : i32
    return %c0_i32, %c0_i32_0 : i32, i32
  }
  func.func @transform_5(%arg0: i32) -> (i32, i32) {
    %c0_i32 = arith.constant 0 : i32
    %c0_i32_0 = arith.constant 0 : i32
    %c0_i32_1 = arith.constant 0 : i32
    return %c0_i32, %c0_i32_0 : i32, i32
  }
  func.func @transform_6(%arg0: i32) -> (i32, i32) {
    %c0_i32 = arith.constant 0 : i32
    %c0_i32_0 = arith.constant 0 : i32
    %c0_i32_1 = arith.constant 0 : i32
    return %c0_i32, %c0_i32_0 : i32, i32
  }
  func.func @transform_7(%arg0: i32) -> (i32, i32) {
    %c0_i32 = arith.constant 0 : i32
    %c0_i32_0 = arith.constant 0 : i32
    %c0_i32_1 = arith.constant 0 : i32
    return %c0_i32, %c0_i32_0 : i32, i32
  }
  func.func @transform_8(%arg0: i32) -> (i32, i32) {
    %c0_i32 = arith.constant 0 : i32
    %c0_i32_0 = arith.constant 0 : i32
    %c0_i32_1 = arith.constant 0 : i32
    return %c0_i32, %c0_i32_0 : i32, i32
  }
  func.func @transform_9(%arg0: i32) -> (i32, i32) {
    %c0_i32 = arith.constant 0 : i32
    %c0_i32_0 = arith.constant 0 : i32
    %c0_i32_1 = arith.constant 0 : i32
    return %c0_i32, %c0_i32_0 : i32, i32
  }
  func.func @transform_10(%arg0: i32) -> (i32, i32) {
    %c0_i32 = arith.constant 0 : i32
    %c0_i32_0 = arith.constant 0 : i32
    %c0_i32_1 = arith.constant 0 : i32
    return %c0_i32, %c0_i32_0 : i32, i32
  }
  func.func @transform_11(%arg0: i32) -> (i32, i32) {
    %c0_i32 = arith.constant 0 : i32
    %c0_i32_0 = arith.constant 0 : i32
    %c0_i32_1 = arith.constant 0 : i32
    return %c0_i32, %c0_i32_0 : i32, i32
  }
  func.func @transform_12(%arg0: i32) -> (i32, i32) {
    %c0_i32 = arith.constant 0 : i32
    %c0_i32_0 = arith.constant 0 : i32
    %c0_i32_1 = arith.constant 0 : i32
    return %c0_i32, %c0_i32_0 : i32, i32
  }
  func.func @transform_13(%arg0: i32) -> (i32, i32) {
    %c0_i32 = arith.constant 0 : i32
    %c0_i32_0 = arith.constant 0 : i32
    %c0_i32_1 = arith.constant 0 : i32
    return %c0_i32, %c0_i32_0 : i32, i32
  }
  func.func @transform_14(%arg0: i32) -> (i32, i32) {
    %c0_i32 = arith.constant 0 : i32
    %c0_i32_0 = arith.constant 0 : i32
    %c0_i32_1 = arith.constant 0 : i32
    return %c0_i32, %c0_i32_0 : i32, i32
  }
  func.func @transform_15(%arg0: i32) -> (i32, i32, i32) {
    %c0_i32 = arith.constant 0 : i32
    %c0_i32_0 = arith.constant 0 : i32
    %c0_i32_1 = arith.constant 0 : i32
    return %arg0, %c0_i32, %c0_i32_0 : i32, i32, i32
  }
}

</mosaic_0001>

<llo_original>
// kernel: residual_lstm_forward.1
$region0: #{residual_lstm_forward.1}
  #allocation0 [shape = 'u32[]', space=smem, size = 0x4, offset = 0x4, fixed_abs, tag = 'smem constant byte address 0x4 - core index']
  #allocation1 [shape = 'u32[72,128]{1,0:T(1,128)}', space=vmem, size = 0x9000, scoped, tag = 'internal scratch']
  #allocation2 [shape = 'f32[8,8,128]{2,1,0:T(8,128)}', space=vmem, size = 0x8000, scoped, tag = 'scratch operand']
  #allocation3 [shape = 'f32[8,8,32]{2,1,0:T(8,128)}', space=vmem, size = 0x8000, scoped, tag = 'scratch operand']
  %s0 = inlined_call_operand.vmem [shape: f32[8,8,64], index: 0, kind: input, shape index: {}]
  %s1 = inlined_call_operand.vmem [shape: bf16[64,128], index: 1, kind: input, shape index: {}]
  %s2 = inlined_call_operand.vmem [shape: f32[1,128], index: 2, kind: input, shape index: {}]
  %s3 = inlined_call_operand.vmem [shape: bf16[32,128], index: 3, kind: input, shape index: {}]
  %s4 = inlined_call_operand.vmem [shape: bf16[32,128], index: 4, kind: input, shape index: {}]
  %s5 = inlined_call_operand.vmem [shape: bf16[32,128], index: 5, kind: input, shape index: {}]
  %s6 = inlined_call_operand.vmem [shape: f32[1,128], index: 6, kind: input, shape index: {}]
  %s7 = inlined_call_operand.vmem [shape: f32[1,32], index: 7, kind: input, shape index: {}]
  %s8 = inlined_call_operand.vmem [shape: f32[1,32], index: 8, kind: input, shape index: {}]
  %s9 = inlined_call_operand.vmem [shape: bf16[32,256], index: 9, kind: input, shape index: {}]
  %s10 = inlined_call_operand.vmem [shape: f32[1,256], index: 10, kind: input, shape index: {}]
  %s11 = inlined_call_operand.vmem [shape: bf16[256,64], index: 11, kind: input, shape index: {}]
  %s12 = inlined_call_operand.vmem [shape: f32[1,64], index: 12, kind: input, shape index: {}]
  %s13 = inlined_call_operand.vmem [shape: f32[1,64], index: 13, kind: input, shape index: {}]
  %s14 = inlined_call_operand.vmem [shape: f32[1,64], index: 14, kind: input, shape index: {}]
  %s15 = inlined_call_operand.vmem [shape: f32[8,8,64], index: 15, kind: output, shape index: {}]
  %s16 = sld [smem:[#allocation0]]
  $region70: #{residual_lstm_forward.1} parent=0
    _
  %s18 = ssub.s32 1, %s16
  %s19 = scalar_select 0, %s18, %s16
  // Predicated region
  $region2: #{residual_lstm_forward.1} parent=0 // pred_check
    _
  $region3: #{residual_lstm_forward.1} parent=0 // pred_check_branch
    %21 = sbr.rel (0) target = $region5
  $region4: #{residual_lstm_forward.1} parent=0 // pred_region
    _
  $region5: #{residual_lstm_forward.1} parent=0 // pred_fallthru
    _
  // Predicated region
  $region6: #{residual_lstm_forward.1} parent=0 // pred_check
    _
  $region7: #{residual_lstm_forward.1} parent=0 // pred_check_branch
    %23 = sbr.rel (0) target = $region9
  $region8: #{residual_lstm_forward.1} parent=0 // pred_region
    _
  $region9: #{residual_lstm_forward.1} parent=0 // pred_fallthru
    _
  // Predicated region
  $region10: #{residual_lstm_forward.1} parent=0 // pred_check
    _
  $region11: #{residual_lstm_forward.1} parent=0 // pred_check_branch
    %25 = sbr.rel (0) target = $region13
  $region12: #{residual_lstm_forward.1} parent=0 // pred_region
    _
  $region13: #{residual_lstm_forward.1} parent=0 // pred_fallthru
    _
  // Predicated region
  $region14: #{residual_lstm_forward.1} parent=0 // pred_check
    _
  $region15: #{residual_lstm_forward.1} parent=0 // pred_check_branch
    %27 = sbr.rel (0) target = $region17
  $region16: #{residual_lstm_forward.1} parent=0 // pred_region
    _
  $region17: #{residual_lstm_forward.1} parent=0 // pred_fallthru
    _
  // Predicated region
  $region18: #{residual_lstm_forward.1} parent=0 // pred_check
    _
  $region19: #{residual_lstm_forward.1} parent=0 // pred_check_branch
    %29 = sbr.rel (0) target = $region21
  $region20: #{residual_lstm_forward.1} parent=0 // pred_region
    _
  $region21: #{residual_lstm_forward.1} parent=0 // pred_fallthru
    _
  // Predicated region
  $region22: #{residual_lstm_forward.1} parent=0 // pred_check
    _
  $region23: #{residual_lstm_forward.1} parent=0 // pred_check_branch
    %31 = sbr.rel (0) target = $region25
  $region24: #{residual_lstm_forward.1} parent=0 // pred_region
    _
  $region25: #{residual_lstm_forward.1} parent=0 // pred_fallthru
    _
  // Predicated region
  $region26: #{residual_lstm_forward.1} parent=0 // pred_check
    _
  $region27: #{residual_lstm_forward.1} parent=0 // pred_check_branch
    %33 = sbr.rel (0) target = $region29
  $region28: #{residual_lstm_forward.1} parent=0 // pred_region
    _
  $region29: #{residual_lstm_forward.1} parent=0 // pred_fallthru
    _
  // Predicated region
  $region30: #{residual_lstm_forward.1} parent=0 // pred_check
    _
  $region31: #{residual_lstm_forward.1} parent=0 // pred_check_branch
    %35 = sbr.rel (0) target = $region33
  $region32: #{residual_lstm_forward.1} parent=0 // pred_region
    _
  $region33: #{residual_lstm_forward.1} parent=0 // pred_fallthru
    _
  // Predicated region
  $region34: #{residual_lstm_forward.1} parent=0 // pred_check
    _
  $region35: #{residual_lstm_forward.1} parent=0 // pred_check_branch
    %37 = sbr.rel (0) target = $region37
  $region36: #{residual_lstm_forward.1} parent=0 // pred_region
    _
  $region37: #{residual_lstm_forward.1} parent=0 // pred_fallthru
    _
  // Predicated region
  $region38: #{residual_lstm_forward.1} parent=0 // pred_check
    _
  $region39: #{residual_lstm_forward.1} parent=0 // pred_check_branch
    %39 = sbr.rel (0) target = $region41
  $region40: #{residual_lstm_forward.1} parent=0 // pred_region
    _
  $region41: #{residual_lstm_forward.1} parent=0 // pred_fallthru
    _
  // Predicated region
  $region42: #{residual_lstm_forward.1} parent=0 // pred_check
    _
  $region43: #{residual_lstm_forward.1} parent=0 // pred_check_branch
    %41 = sbr.rel (0) target = $region45
  $region44: #{residual_lstm_forward.1} parent=0 // pred_region
    _
  $region45: #{residual_lstm_forward.1} parent=0 // pred_fallthru
    _
  // Predicated region
  $region46: #{residual_lstm_forward.1} parent=0 // pred_check
    _
  $region47: #{residual_lstm_forward.1} parent=0 // pred_check_branch
    %43 = sbr.rel (0) target = $region49
  $region48: #{residual_lstm_forward.1} parent=0 // pred_region
    _
  $region49: #{residual_lstm_forward.1} parent=0 // pred_fallthru
    _
  // Predicated region
  $region50: #{residual_lstm_forward.1} parent=0 // pred_check
    _
  $region51: #{residual_lstm_forward.1} parent=0 // pred_check_branch
    %45 = sbr.rel (0) target = $region53
  $region52: #{residual_lstm_forward.1} parent=0 // pred_region
    _
  $region53: #{residual_lstm_forward.1} parent=0 // pred_fallthru
    _
  // Predicated region
  $region54: #{residual_lstm_forward.1} parent=0 // pred_check
    _
  $region55: #{residual_lstm_forward.1} parent=0 // pred_check_branch
    %47 = sbr.rel (0) target = $region57
  $region56: #{residual_lstm_forward.1} parent=0 // pred_region
    _
  $region57: #{residual_lstm_forward.1} parent=0 // pred_fallthru
    _
  // Predicated region
  $region58: #{residual_lstm_forward.1} parent=0 // pred_check
    _
  $region59: #{residual_lstm_forward.1} parent=0 // pred_check_branch
    %49 = sbr.rel (0) target = $region61
  $region60: #{residual_lstm_forward.1} parent=0 // pred_region
    _
  $region61: #{residual_lstm_forward.1} parent=0 // pred_fallthru
    _
  %v51 = vld [vmem:[%s0] sm:$0xff]
  %v52 = vld [vmem:[%s0 + $0x8] sm:$0xff]
  %v53 = vld [vmem:[%s0 + $0x10] sm:$0xff]
  %v54 = vld [vmem:[%s0 + $0x18] sm:$0xff]
  %v55 = vld [vmem:[%s0 + $0x20] sm:$0xff]
  %v56 = vld [vmem:[%s0 + $0x28] sm:$0xff]
  %v57 = vld [vmem:[%s0 + $0x30] sm:$0xff]
  %v58 = vld [vmem:[%s0 + $0x38] sm:$0xff]
  %v59 = vpack.c.bf16 %v52, %v51
  %v60 = vpack.c.bf16 %v54, %v53
  %v61 = vpack.c.bf16 %v56, %v55
  %v62 = vpack.c.bf16 %v58, %v57
  %v63 = vld [vmem:[%s1] sm:$0xf]
  %v64 = vld [vmem:[%s1 + $0x4] sm:$0xf]
  %v65 = vld [vmem:[%s1 + $0x8] sm:$0xf]
  %v66 = vld [vmem:[%s1 + $0xc] sm:$0xf]
  %v67 = vld [vmem:[%s1 + $0x10] sm:$0xf]
  %v68 = vld [vmem:[%s1 + $0x14] sm:$0xf]
  %v69 = vld [vmem:[%s1 + $0x18] sm:$0xf]
  %v70 = vld [vmem:[%s1 + $0x1c] sm:$0xf]
  %v71 = vld [vmem:[%s2] sm:$0x1]
  %v73 = vperm.slane %v71, 0
  %v83 = vunpack.c.l.b16 %v63
  %v84 = vunpack.c.l.b16 %v64
  %v85 = vunpack.c.l.b16 %v65
  %v86 = vunpack.c.l.b16 %v66
  %v87 = vunpack.c.l.b16 %v67
  %v88 = vunpack.c.l.b16 %v68
  %v89 = vunpack.c.l.b16 %v69
  %v90 = vunpack.c.l.b16 %v70
  %v91 = vpack.c.b16 %v84, %v83
  %v92 = vpack.c.b16 %v86, %v85
  %v93 = vpack.c.b16 %v88, %v87
  %v94 = vpack.c.b16 %v90, %v89
  %vm99 = vcmask 523264
  %v101 = vsel %vm99, %v59, 0
  %v104 = vsel %vm99, %v60, 0
  %v107 = vsel %vm99, %v61, 0
  %v110 = vsel %vm99, %v62, 0
  %112 = vmatpush.bf16.msra.mxu0 0
  %113 = vmatpush.bf16.msra.mxu0 0
  %114 = vmatpush.bf16.msra.mxu0 0
  %115 = vmatpush.bf16.msra.mxu0 0
  %116 = vmatpush.bf16.msra.mxu0 %v94
  %117 = vmatpush.bf16.msra.mxu0 %v93
  %118 = vmatpush.bf16.msra.mxu0 %v92
  %119 = vmatpush.bf16.msra.mxu0 %v91
  %120 = vmatmul.bf16.gmra.mxu0 %v101
  %v121 = vpop.f32.mrf.mxu0
  %v122 = vadd.f32 %v73, %v121
  %v123 = vpop.f32.mrf.mxu0
  %v124 = vadd.f32 %v73, %v123
  %125 = vmatmul.bf16.gmra.mxu0 %v104
  %v126 = vpop.f32.mrf.mxu0
  %v127 = vadd.f32 %v73, %v126
  %v128 = vpop.f32.mrf.mxu0
  %v129 = vadd.f32 %v73, %v128
  %130 = vmatmul.bf16.gmra.mxu0 %v107
  %v131 = vpop.f32.mrf.mxu0
  %v132 = vadd.f32 %v73, %v131
  %v133 = vpop.f32.mrf.mxu0
  %v134 = vadd.f32 %v73, %v133
  %135 = vmatmul.bf16.gmra.mxu0 %v110
  %v136 = vpop.f32.mrf.mxu0
  %v137 = vadd.f32 %v73, %v136
  %v138 = vpop.f32.mrf.mxu0
  %v139 = vadd.f32 %v73, %v138
  %140 = vdwg.mxu0
  %141 = vst [vmem:[#allocation2] sm:$0xff] %v122
  %142 = vst [vmem:[#allocation2 + $0x8] sm:$0xff] %v124
  %143 = vst [vmem:[#allocation2 + $0x10] sm:$0xff] %v127
  %144 = vst [vmem:[#allocation2 + $0x18] sm:$0xff] %v129
  %145 = vst [vmem:[#allocation2 + $0x20] sm:$0xff] %v132
  %146 = vst [vmem:[#allocation2 + $0x28] sm:$0xff] %v134
  %147 = vst [vmem:[#allocation2 + $0x30] sm:$0xff] %v137
  %148 = vst [vmem:[#allocation2 + $0x38] sm:$0xff] %v139
  %v149 = vld [vmem:[%s3] sm:$0xf]
  %v150 = vld [vmem:[%s3 + $0x4] sm:$0xf]
  %v151 = vld [vmem:[%s3 + $0x8] sm:$0xf]
  %v152 = vld [vmem:[%s3 + $0xc] sm:$0xf]
  %v153 = vld [vmem:[#allocation2] sm:$0xff]
  %v158 = vunpack.c.l.b16 %v149
  %v159 = vunpack.c.l.b16 %v150
  %v160 = vunpack.c.l.b16 %v151
  %v161 = vunpack.c.l.b16 %v152
  %v162 = vpack.c.b16 %v159, %v158
  %v163 = vpack.c.b16 %v161, %v160
  %vm166 = vcmask 261120
  %v168 = vsel %vm166, 0, 0
  %170 = vmatpush.bf16.msra.mxu0 0
  %171 = vmatpush.bf16.msra.mxu0 0
  %172 = vmatpush.bf16.msra.mxu0 0
  %173 = vmatpush.bf16.msra.mxu0 0
  %174 = vmatpush.bf16.msra.mxu0 0
  %175 = vmatpush.bf16.msra.mxu0 0
  %176 = vmatpush.bf16.msra.mxu0 %v163
  %177 = vmatpush.bf16.msra.mxu0 %v162
  %178 = vmatmul.bf16.gmra.mxu0 %v168
  %v179 = vpop.f32.mrf.mxu0
  %v180 = vadd.f32 0.0, %v179
  %v181 = vpop.f32.mrf.mxu0
  %182 = vdwg.mxu0
  %v183 = vadd.f32 %v153, %v180
  %v184 = vxor.u32 %v183, 2147483648
  %v185 = vmul.f32 %v184, 1.442695
  %v186 = vpow.pop %v185
  %v187 = vadd.f32 %v186, 1.0
  %v188 = vrcp.pop %v187
  %v189 = vmul.f32 %v187, %v188
  %v190 = vsub.f32 1.0, %v189
  %v191 = vmul.f32 %v188, %v190
  %v192 = vadd.f32 %v188, %v191
  %vm193 = vweird.f32 %v187
  %vm194 = vweird.f32 %v188
  %vm195 = vmor %vm193, %vm194
  %v196 = vsel %vm195, %v188, %v192
  %v197 = vand.u32 2147483647, %v187
  %vm198 = vcmp.eq.f32.partialorder %v197, 8.507059e+37
  %v199 = vand.u32 %v187, 2147483648
  %v200 = vor.u32 1.1754944e-38, %v199
  %v201 = vsel %vm198, %v200, %v196
  %v202 = vmul.f32 1.0, %v201
  %v203 = vtanh.pop %v183
  %v204 = vmul.f32 %v202, 0.0
  %206 = vrot.lane.b32.xlu0 %v203, 32
  %v207 = vpop.permute.xlu0 %206
  %v209 = vmul.f32 %v202, %v207
  %211 = vrot.lane.b32.xlu0 %v209, 32
  %v212 = vpop.permute.xlu0 %211
  %v214 = vadd.f32 %v204, %v212
  %v215 = vtanh.pop %v214
  %217 = vrot.lane.b32.xlu0 %v215, 32
  %v218 = vpop.permute.xlu0 %217
  %v220 = vmul.f32 %v202, %v218
  %222 = vrot.lane.b32.xlu0 %v220, 64
  %v223 = vpop.permute.xlu0 %222
  %225 = vst.msk [vmem:[#allocation3] sm:$0xff] %vm166, %v223
  %s226 = scalar_lea.vmem [#allocation2], 8
  %v227 = vld [vmem:[%s226] sm:$0xff]
  %v228 = vpack.c.bf16 %v220, %v220
  %230 = vrot.lane.b32.xlu0 %v228, 64
  %v231 = vpop.permute.xlu0 %230
  %v233 = vsel %vm166, %v231, 0
  %235 = vmatpush.bf16.msra.mxu0 0
  %236 = vmatpush.bf16.msra.mxu0 0
  %237 = vmatpush.bf16.msra.mxu0 0
  %238 = vmatpush.bf16.msra.mxu0 0
  %239 = vmatpush.bf16.msra.mxu0 0
  %240 = vmatpush.bf16.msra.mxu0 0
  %241 = vmatpush.bf16.msra.mxu0 %v163
  %242 = vmatpush.bf16.msra.mxu0 %v162
  %243 = vmatmul.bf16.gmra.mxu0 %v233
  %v244 = vpop.f32.mrf.mxu0
  %v245 = vadd.f32 0.0, %v244
  %v246 = vpop.f32.mrf.mxu0
  %247 = vdwg.mxu0
  %v248 = vadd.f32 %v227, %v245
  %v249 = vxor.u32 %v248, 2147483648
  %v250 = vmul.f32 %v249, 1.442695
  %v251 = vpow.pop %v250
  %v252 = vadd.f32 %v251, 1.0
  %v253 = vrcp.pop %v252
  %v254 = vmul.f32 %v252, %v253
  %v255 = vsub.f32 1.0, %v254
  %v256 = vmul.f32 %v253, %v255
  %v257 = vadd.f32 %v253, %v256
  %vm258 = vweird.f32 %v252
  %vm259 = vweird.f32 %v253
  %vm260 = vmor %vm258, %vm259
  %v261 = vsel %vm260, %v253, %v257
  %v262 = vand.u32 2147483647, %v252
  %vm263 = vcmp.eq.f32.partialorder %v262, 8.507059e+37
  %v264 = vand.u32 %v252, 2147483648
  %v265 = vor.u32 1.1754944e-38, %v264
  %v266 = vsel %vm263, %v265, %v261
  %v267 = vmul.f32 1.0, %v266
  %v268 = vtanh.pop %v248
  %v269 = vmul.f32 %v267, %v214
  %271 = vrot.lane.b32.xlu0 %v268, 32
  %v272 = vpop.permute.xlu0 %271
  %v274 = vmul.f32 %v267, %v272
  %276 = vrot.lane.b32.xlu0 %v274, 32
  %v277 = vpop.permute.xlu0 %276
  %v279 = vadd.f32 %v269, %v277
  %v280 = vtanh.pop %v279
  %282 = vrot.lane.b32.xlu0 %v280, 32
  %v283 = vpop.permute.xlu0 %282
  %v285 = vmul.f32 %v267, %v283
  %287 = vrot.lane.b32.xlu0 %v285, 64
  %v288 = vpop.permute.xlu0 %287
  %s290 = scalar_lea.vmem [#allocation3], 8
  %291 = vst.msk [vmem:[%s290] sm:$0xff] %vm166, %v288
  %s292 = scalar_lea.vmem [#allocation2], 16
  %v293 = vld [vmem:[%s292] sm:$0xff]
  %v294 = vpack.c.bf16 %v285, %v285
  %296 = vrot.lane.b32.xlu0 %v294, 64
  %v297 = vpop.permute.xlu0 %296
  %v299 = vsel %vm166, %v297, 0
  %301 = vmatpush.bf16.msra.mxu0 0
  %302 = vmatpush.bf16.msra.mxu0 0
  %303 = vmatpush.bf16.msra.mxu0 0
  %304 = vmatpush.bf16.msra.mxu0 0
  %305 = vmatpush.bf16.msra.mxu0 0
  %306 = vmatpush.bf16.msra.mxu0 0
  %307 = vmatpush.bf16.msra.mxu0 %v163
  %308 = vmatpush.bf16.msra.mxu0 %v162
  %309 = vmatmul.bf16.gmra.mxu0 %v299
  %v310 = vpop.f32.mrf.mxu0
  %v311 = vadd.f32 0.0, %v310
  %v312 = vpop.f32.mrf.mxu0
  %313 = vdwg.mxu0
  %v314 = vadd.f32 %v293, %v311
  %v315 = vxor.u32 %v314, 2147483648
  %v316 = vmul.f32 %v315, 1.442695
  %v317 = vpow.pop %v316
  %v318 = vadd.f32 %v317, 1.0
  %v319 = vrcp.pop %v318
  %v320 = vmul.f32 %v318, %v319
  %v321 = vsub.f32 1.0, %v320
  %v322 = vmul.f32 %v319, %v321
  %v323 = vadd.f32 %v319, %v322
  %vm324 = vweird.f32 %v318
  %vm325 = vweird.f32 %v319
  %vm326 = vmor %vm324, %vm325
  %v327 = vsel %vm326, %v319, %v323
  %v328 = vand.u32 2147483647, %v318
  %vm329 = vcmp.eq.f32.partialorder %v328, 8.507059e+37
  %v330 = vand.u32 %v318, 2147483648
  %v331 = vor.u32 1.1754944e-38, %v330
  %v332 = vsel %vm329, %v331, %v327
  %v333 = vmul.f32 1.0, %v332
  %v334 = vtanh.pop %v314
  %v335 = vmul.f32 %v333, %v279
  %337 = vrot.lane.b32.xlu0 %v334, 32
  %v338 = vpop.permute.xlu0 %337
  %v340 = vmul.f32 %v333, %v338
  %342 = vrot.lane.b32.xlu0 %v340, 32
  %v343 = vpop.permute.xlu0 %342
  %v345 = vadd.f32 %v335, %v343
  %v346 = vtanh.pop %v345
  %348 = vrot.lane.b32.xlu0 %v346, 32
  %v349 = vpop.permute.xlu0 %348
  %v351 = vmul.f32 %v333, %v349
  %353 = vrot.lane.b32.xlu0 %v351, 64
  %v354 = vpop.permute.xlu0 %353
  %s356 = scalar_lea.vmem [#allocation3], 16
  %357 = vst.msk [vmem:[%s356] sm:$0xff] %vm166, %v354
  %s358 = scalar_lea.vmem [#allocation2], 24
  %v359 = vld [vmem:[%s358] sm:$0xff]
  %v360 = vpack.c.bf16 %v351, %v351
  %362 = vrot.lane.b32.xlu0 %v360, 64
  %v363 = vpop.permute.xlu0 %362
  %v365 = vsel %vm166, %v363, 0
  %367 = vmatpush.bf16.msra.mxu0 0
  %368 = vmatpush.bf16.msra.mxu0 0
  %369 = vmatpush.bf16.msra.mxu0 0
  %370 = vmatpush.bf16.msra.mxu0 0
  %371 = vmatpush.bf16.msra.mxu0 0
  %372 = vmatpush.bf16.msra.mxu0 0
  %373 = vmatpush.bf16.msra.mxu0 %v163
  %374 = vmatpush.bf16.msra.mxu0 %v162
  %375 = vmatmul.bf16.gmra.mxu0 %v365
  %v376 = vpop.f32.mrf.mxu0
  %v377 = vadd.f32 0.0, %v376
  %v378 = vpop.f32.mrf.mxu0
  %379 = vdwg.mxu0
  %v380 = vadd.f32 %v359, %v377
  %v381 = vxor.u32 %v380, 2147483648
  %v382 = vmul.f32 %v381, 1.442695
  %v383 = vpow.pop %v382
  %v384 = vadd.f32 %v383, 1.0
  %v385 = vrcp.pop %v384
  %v386 = vmul.f32 %v384, %v385
  %v387 = vsub.f32 1.0, %v386
  %v388 = vmul.f32 %v385, %v387
  %v389 = vadd.f32 %v385, %v388
  %vm390 = vweird.f32 %v384
  %vm391 = vweird.f32 %v385
  %vm392 = vmor %vm390, %vm391
  %v393 = vsel %vm392, %v385, %v389
  %v394 = vand.u32 2147483647, %v384
  %vm395 = vcmp.eq.f32.partialorder %v394, 8.507059e+37
  %v396 = vand.u32 %v384, 2147483648
  %v397 = vor.u32 1.1754944e-38, %v396
  %v398 = vsel %vm395, %v397, %v393
  %v399 = vmul.f32 1.0, %v398
  %v400 = vtanh.pop %v380
  %v401 = vmul.f32 %v399, %v345
  %403 = vrot.lane.b32.xlu0 %v400, 32
  %v404 = vpop.permute.xlu0 %403
  %v406 = vmul.f32 %v399, %v404
  %408 = vrot.lane.b32.xlu0 %v406, 32
  %v409 = vpop.permute.xlu0 %408
  %v411 = vadd.f32 %v401, %v409
  %v412 = vtanh.pop %v411
  %414 = vrot.lane.b32.xlu0 %v412, 32
  %v415 = vpop.permute.xlu0 %414
  %v417 = vmul.f32 %v399, %v415
  %419 = vrot.lane.b32.xlu0 %v417, 64
  %v420 = vpop.permute.xlu0 %419
  %s422 = scalar_lea.vmem [#allocation3], 24
  %423 = vst.msk [vmem:[%s422] sm:$0xff] %vm166, %v420
  %s424 = scalar_lea.vmem [#allocation2], 32
  %v425 = vld [vmem:[%s424] sm:$0xff]
  %v426 = vpack.c.bf16 %v417, %v417
  %428 = vrot.lane.b32.xlu0 %v426, 64
  %v429 = vpop.permute.xlu0 %428
  %v431 = vsel %vm166, %v429, 0
  %433 = vmatpush.bf16.msra.mxu0 0
  %434 = vmatpush.bf16.msra.mxu0 0
  %435 = vmatpush.bf16.msra.mxu0 0
  %436 = vmatpush.bf16.msra.mxu0 0
  %437 = vmatpush.bf16.msra.mxu0 0
  %438 = vmatpush.bf16.msra.mxu0 0
  %439 = vmatpush.bf16.msra.mxu0 %v163
  %440 = vmatpush.bf16.msra.mxu0 %v162
  %441 = vmatmul.bf16.gmra.mxu0 %v431
  %v442 = vpop.f32.mrf.mxu0
  %v443 = vadd.f32 0.0, %v442
  %v444 = vpop.f32.mrf.mxu0
  %445 = vdwg.mxu0
  %v446 = vadd.f32 %v425, %v443
  %v447 = vxor.u32 %v446, 2147483648
  %v448 = vmul.f32 %v447, 1.442695
  %v449 = vpow.pop %v448
  %v450 = vadd.f32 %v449, 1.0
  %v451 = vrcp.pop %v450
  %v452 = vmul.f32 %v450, %v451
  %v453 = vsub.f32 1.0, %v452
  %v454 = vmul.f32 %v451, %v453
  %v455 = vadd.f32 %v451, %v454
  %vm456 = vweird.f32 %v450
  %vm457 = vweird.f32 %v451
  %vm458 = vmor %vm456, %vm457
  %v459 = vsel %vm458, %v451, %v455
  %v460 = vand.u32 2147483647, %v450
  %vm461 = vcmp.eq.f32.partialorder %v460, 8.507059e+37
  %v462 = vand.u32 %v450, 2147483648
  %v463 = vor.u32 1.1754944e-38, %v462
  %v464 = vsel %vm461, %v463, %v459
  %v465 = vmul.f32 1.0, %v464
  %v466 = vtanh.pop %v446
  %v467 = vmul.f32 %v465, %v411
  %469 = vrot.lane.b32.xlu0 %v466, 32
  %v470 = vpop.permute.xlu0 %469
  %v472 = vmul.f32 %v465, %v470
  %474 = vrot.lane.b32.xlu0 %v472, 32
  %v475 = vpop.permute.xlu0 %474
  %v477 = vadd.f32 %v467, %v475
  %v478 = vtanh.pop %v477
  %480 = vrot.lane.b32.xlu0 %v478, 32
  %v481 = vpop.permute.xlu0 %480
  %v483 = vmul.f32 %v465, %v481
  %485 = vrot.lane.b32.xlu0 %v483, 64
  %v486 = vpop.permute.xlu0 %485
  %s488 = scalar_lea.vmem [#allocation3], 32
  %489 = vst.msk [vmem:[%s488] sm:$0xff] %vm166, %v486
  %s490 = scalar_lea.vmem [#allocation2], 40
  %v491 = vld [vmem:[%s490] sm:$0xff]
  %v492 = vpack.c.bf16 %v483, %v483
  %494 = vrot.lane.b32.xlu0 %v492, 64
  %v495 = vpop.permute.xlu0 %494
  %v497 = vsel %vm166, %v495, 0
  %499 = vmatpush.bf16.msra.mxu0 0
  %500 = vmatpush.bf16.msra.mxu0 0
  %501 = vmatpush.bf16.msra.mxu0 0
  %502 = vmatpush.bf16.msra.mxu0 0
  %503 = vmatpush.bf16.msra.mxu0 0
  %504 = vmatpush.bf16.msra.mxu0 0
  %505 = vmatpush.bf16.msra.mxu0 %v163
  %506 = vmatpush.bf16.msra.mxu0 %v162
  %507 = vmatmul.bf16.gmra.mxu0 %v497
  %v508 = vpop.f32.mrf.mxu0
  %v509 = vadd.f32 0.0, %v508
  %v510 = vpop.f32.mrf.mxu0
  %511 = vdwg.mxu0
  %v512 = vadd.f32 %v491, %v509
  %v513 = vxor.u32 %v512, 2147483648
  %v514 = vmul.f32 %v513, 1.442695
  %v515 = vpow.pop %v514
  %v516 = vadd.f32 %v515, 1.0
  %v517 = vrcp.pop %v516
  %v518 = vmul.f32 %v516, %v517
  %v519 = vsub.f32 1.0, %v518
  %v520 = vmul.f32 %v517, %v519
  %v521 = vadd.f32 %v517, %v520
  %vm522 = vweird.f32 %v516
  %vm523 = vweird.f32 %v517
  %vm524 = vmor %vm522, %vm523
  %v525 = vsel %vm524, %v517, %v521
  %v526 = vand.u32 2147483647, %v516
  %vm527 = vcmp.eq.f32.partialorder %v526, 8.507059e+37
  %v528 = vand.u32 %v516, 2147483648
  %v529 = vor.u32 1.1754944e-38, %v528
  %v530 = vsel %vm527, %v529, %v525
  %v531 = vmul.f32 1.0, %v530
  %v532 = vtanh.pop %v512
  %v533 = vmul.f32 %v531, %v477
  %535 = vrot.lane.b32.xlu0 %v532, 32
  %v536 = vpop.permute.xlu0 %535
  %v538 = vmul.f32 %v531, %v536
  %540 = vrot.lane.b32.xlu0 %v538, 32
  %v541 = vpop.permute.xlu0 %540
  %v543 = vadd.f32 %v533, %v541
  %v544 = vtanh.pop %v543
  %546 = vrot.lane.b32.xlu0 %v544, 32
  %v547 = vpop.permute.xlu0 %546
  %v549 = vmul.f32 %v531, %v547
  %551 = vrot.lane.b32.xlu0 %v549, 64
  %v552 = vpop.permute.xlu0 %551
  %s554 = scalar_lea.vmem [#allocation3], 40
  %555 = vst.msk [vmem:[%s554] sm:$0xff] %vm166, %v552
  %s556 = scalar_lea.vmem [#allocation2], 48
  %v557 = vld [vmem:[%s556] sm:$0xff]
  %v558 = vpack.c.bf16 %v549, %v549
  %560 = vrot.lane.b32.xlu0 %v558, 64
  %v561 = vpop.permute.xlu0 %560
  %v563 = vsel %vm166, %v561, 0
  %565 = vmatpush.bf16.msra.mxu0 0
  %566 = vmatpush.bf16.msra.mxu0 0
  %567 = vmatpush.bf16.msra.mxu0 0
  %568 = vmatpush.bf16.msra.mxu0 0
  %569 = vmatpush.bf16.msra.mxu0 0
  %570 = vmatpush.bf16.msra.mxu0 0
  %571 = vmatpush.bf16.msra.mxu0 %v163
  %572 = vmatpush.bf16.msra.mxu0 %v162
  %573 = vmatmul.bf16.gmra.mxu0 %v563
  %v574 = vpop.f32.mrf.mxu0
  %v575 = vadd.f32 0.0, %v574
  %v576 = vpop.f32.mrf.mxu0
  %577 = vdwg.mxu0
  %v578 = vadd.f32 %v557, %v575
  %v579 = vxor.u32 %v578, 2147483648
  %v580 = vmul.f32 %v579, 1.442695
  %v581 = vpow.pop %v580
  %v582 = vadd.f32 %v581, 1.0
  %v583 = vrcp.pop %v582
  %v584 = vmul.f32 %v582, %v583
  %v585 = vsub.f32 1.0, %v584
  %v586 = vmul.f32 %v583, %v585
  %v587 = vadd.f32 %v583, %v586
  %vm588 = vweird.f32 %v582
  %vm589 = vweird.f32 %v583
  %vm590 = vmor %vm588, %vm589
  %v591 = vsel %vm590, %v583, %v587
  %v592 = vand.u32 2147483647, %v582
  %vm593 = vcmp.eq.f32.partialorder %v592, 8.507059e+37
  %v594 = vand.u32 %v582, 2147483648
  %v595 = vor.u32 1.1754944e-38, %v594
  %v596 = vsel %vm593, %v595, %v591
  %v597 = vmul.f32 1.0, %v596
  %v598 = vtanh.pop %v578
  %v599 = vmul.f32 %v597, %v543
  %601 = vrot.lane.b32.xlu0 %v598, 32
  %v602 = vpop.permute.xlu0 %601
  %v604 = vmul.f32 %v597, %v602
  %606 = vrot.lane.b32.xlu0 %v604, 32
  %v607 = vpop.permute.xlu0 %606
  %v609 = vadd.f32 %v599, %v607
  %v610 = vtanh.pop %v609
  %612 = vrot.lane.b32.xlu0 %v610, 32
  %v613 = vpop.permute.xlu0 %612
  %v615 = vmul.f32 %v597, %v613
  %617 = vrot.lane.b32.xlu0 %v615, 64
  %v618 = vpop.permute.xlu0 %617
  %s620 = scalar_lea.vmem [#allocation3], 48
  %621 = vst.msk [vmem:[%s620] sm:$0xff] %vm166, %v618
  %s622 = scalar_lea.vmem [#allocation2], 56
  %v623 = vld [vmem:[%s622] sm:$0xff]
  %v624 = vpack.c.bf16 %v615, %v615
  %626 = vrot.lane.b32.xlu0 %v624, 64
  %v627 = vpop.permute.xlu0 %626
  %v629 = vsel %vm166, %v627, 0
  %631 = vmatpush.bf16.msra.mxu0 0
  %632 = vmatpush.bf16.msra.mxu0 0
  %633 = vmatpush.bf16.msra.mxu0 0
  %634 = vmatpush.bf16.msra.mxu0 0
  %635 = vmatpush.bf16.msra.mxu0 0
  %636 = vmatpush.bf16.msra.mxu0 0
  %637 = vmatpush.bf16.msra.mxu0 %v163
  %638 = vmatpush.bf16.msra.mxu0 %v162
  %639 = vmatmul.bf16.gmra.mxu0 %v629
  %v640 = vpop.f32.mrf.mxu0
  %v641 = vadd.f32 0.0, %v640
  %v642 = vpop.f32.mrf.mxu0
  %643 = vdwg.mxu0
  %v644 = vadd.f32 %v623, %v641
  %v645 = vxor.u32 %v644, 2147483648
  %v646 = vmul.f32 %v645, 1.442695
  %v647 = vpow.pop %v646
  %v648 = vadd.f32 %v647, 1.0
  %v649 = vrcp.pop %v648
  %v650 = vmul.f32 %v648, %v649
  %v651 = vsub.f32 1.0, %v650
  %v652 = vmul.f32 %v649, %v651
  %v653 = vadd.f32 %v649, %v652
  %vm654 = vweird.f32 %v648
  %vm655 = vweird.f32 %v649
  %vm656 = vmor %vm654, %vm655
  %v657 = vsel %vm656, %v649, %v653
  %v658 = vand.u32 2147483647, %v648
  %vm659 = vcmp.eq.f32.partialorder %v658, 8.507059e+37
  %v660 = vand.u32 %v648, 2147483648
  %v661 = vor.u32 1.1754944e-38, %v660
  %v662 = vsel %vm659, %v661, %v657
  %v663 = vmul.f32 1.0, %v662
  %v664 = vtanh.pop %v644
  %v665 = vmul.f32 %v663, %v609
  %667 = vrot.lane.b32.xlu0 %v664, 32
  %v668 = vpop.permute.xlu0 %667
  %v670 = vmul.f32 %v663, %v668
  %672 = vrot.lane.b32.xlu0 %v670, 32
  %v673 = vpop.permute.xlu0 %672
  %v675 = vadd.f32 %v665, %v673
  %v676 = vtanh.pop %v675
  %678 = vrot.lane.b32.xlu0 %v676, 32
  %v679 = vpop.permute.xlu0 %678
  %v681 = vmul.f32 %v663, %v679
  %683 = vrot.lane.b32.xlu0 %v681, 64
  %v684 = vpop.permute.xlu0 %683
  %s686 = scalar_lea.vmem [#allocation3], 56
  %687 = vst.msk [vmem:[%s686] sm:$0xff] %vm166, %v684
  %v688 = vld [vmem:[#allocation3] sm:$0xff]
  %v689 = vld [vmem:[#allocation3 + $0x8] sm:$0xff]
  %v690 = vld [vmem:[#allocation3 + $0x10] sm:$0xff]
  %v691 = vld [vmem:[#allocation3 + $0x18] sm:$0xff]
  %v692 = vld [vmem:[#allocation3 + $0x20] sm:$0xff]
  %v693 = vld [vmem:[#allocation3 + $0x28] sm:$0xff]
  %v694 = vld [vmem:[#allocation3 + $0x30] sm:$0xff]
  %v695 = vld [vmem:[#allocation3 + $0x38] sm:$0xff]
  %v696 = vpack.c.bf16 %v689, %v688
  %v697 = vpack.c.bf16 %v691, %v690
  %v698 = vpack.c.bf16 %v693, %v692
  %v699 = vpack.c.bf16 %v695, %v694
  %v700 = vld [vmem:[%s4] sm:$0xf]
  %v701 = vld [vmem:[%s4 + $0x4] sm:$0xf]
  %v702 = vld [vmem:[%s4 + $0x8] sm:$0xf]
  %v703 = vld [vmem:[%s4 + $0xc] sm:$0xf]
  %v704 = vld [vmem:[%s6] sm:$0x1]
  %v706 = vperm.slane %v704, 0
  %v712 = vunpack.c.l.b16 %v700
  %v713 = vunpack.c.l.b16 %v701
  %v714 = vunpack.c.l.b16 %v702
  %v715 = vunpack.c.l.b16 %v703
  %v716 = vpack.c.b16 %v713, %v712
  %v717 = vpack.c.b16 %v715, %v714
  %v721 = vsel %vm166, %v696, 0
  %v724 = vsel %vm166, %v697, 0
  %v727 = vsel %vm166, %v698, 0
  %v730 = vsel %vm166, %v699, 0
  %732 = vmatpush.bf16.msra.mxu0 0
  %733 = vmatpush.bf16.msra.mxu0 0
  %734 = vmatpush.bf16.msra.mxu0 0
  %735 = vmatpush.bf16.msra.mxu0 0
  %736 = vmatpush.bf16.msra.mxu0 0
  %737 = vmatpush.bf16.msra.mxu0 0
  %738 = vmatpush.bf16.msra.mxu0 %v717
  %739 = vmatpush.bf16.msra.mxu0 %v716
  %740 = vmatmul.bf16.gmra.mxu0 %v721
  %v741 = vpop.f32.mrf.mxu0
  %v742 = vadd.f32 %v706, %v741
  %v743 = vpop.f32.mrf.mxu0
  %v744 = vadd.f32 %v706, %v743
  %745 = vmatmul.bf16.gmra.mxu0 %v724
  %v746 = vpop.f32.mrf.mxu0
  %v747 = vadd.f32 %v706, %v746
  %v748 = vpop.f32.mrf.mxu0
  %v749 = vadd.f32 %v706, %v748
  %750 = vmatmul.bf16.gmra.mxu0 %v727
  %v751 = vpop.f32.mrf.mxu0
  %v752 = vadd.f32 %v706, %v751
  %v753 = vpop.f32.mrf.mxu0
  %v754 = vadd.f32 %v706, %v753
  %755 = vmatmul.bf16.gmra.mxu0 %v730
  %v756 = vpop.f32.mrf.mxu0
  %v757 = vadd.f32 %v706, %v756
  %v758 = vpop.f32.mrf.mxu0
  %v759 = vadd.f32 %v706, %v758
  %760 = vdwg.mxu0
  %761 = vst [vmem:[#allocation2] sm:$0xff] %v742
  %762 = vst [vmem:[#allocation2 + $0x8] sm:$0xff] %v744
  %763 = vst [vmem:[#allocation2 + $0x10] sm:$0xff] %v747
  %764 = vst [vmem:[#allocation2 + $0x18] sm:$0xff] %v749
  %765 = vst [vmem:[#allocation2 + $0x20] sm:$0xff] %v752
  %766 = vst [vmem:[#allocation2 + $0x28] sm:$0xff] %v754
  %767 = vst [vmem:[#allocation2 + $0x30] sm:$0xff] %v757
  %768 = vst [vmem:[#allocation2 + $0x38] sm:$0xff] %v759
  %v769 = vld [vmem:[%s5] sm:$0xf]
  %v770 = vld [vmem:[%s5 + $0x4] sm:$0xf]
  %v771 = vld [vmem:[%s5 + $0x8] sm:$0xf]
  %v772 = vld [vmem:[%s5 + $0xc] sm:$0xf]
  %v773 = vld [vmem:[#allocation2] sm:$0xff]
  %v778 = vunpack.c.l.b16 %v769
  %v779 = vunpack.c.l.b16 %v770
  %v780 = vunpack.c.l.b16 %v771
  %v781 = vunpack.c.l.b16 %v772
  %v782 = vpack.c.b16 %v779, %v778
  %v783 = vpack.c.b16 %v781, %v780
  %786 = vmatpush.bf16.msra.mxu0 0
  %787 = vmatpush.bf16.msra.mxu0 0
  %788 = vmatpush.bf16.msra.mxu0 0
  %789 = vmatpush.bf16.msra.mxu0 0
  %790 = vmatpush.bf16.msra.mxu0 0
  %791 = vmatpush.bf16.msra.mxu0 0
  %792 = vmatpush.bf16.msra.mxu0 %v783
  %793 = vmatpush.bf16.msra.mxu0 %v782
  %794 = vmatmul.bf16.gmra.mxu0 %v168
  %v795 = vpop.f32.mrf.mxu0
  %v796 = vadd.f32 0.0, %v795
  %v797 = vpop.f32.mrf.mxu0
  %798 = vdwg.mxu0
  %v799 = vadd.f32 %v773, %v796
  %v800 = vxor.u32 %v799, 2147483648
  %v801 = vmul.f32 %v800, 1.442695
  %v802 = vpow.pop %v801
  %v803 = vadd.f32 %v802, 1.0
  %v804 = vrcp.pop %v803
  %v805 = vmul.f32 %v803, %v804
  %v806 = vsub.f32 1.0, %v805
  %v807 = vmul.f32 %v804, %v806
  %v808 = vadd.f32 %v804, %v807
  %vm809 = vweird.f32 %v803
  %vm810 = vweird.f32 %v804
  %vm811 = vmor %vm809, %vm810
  %v812 = vsel %vm811, %v804, %v808
  %v813 = vand.u32 2147483647, %v803
  %vm814 = vcmp.eq.f32.partialorder %v813, 8.507059e+37
  %v815 = vand.u32 %v803, 2147483648
  %v816 = vor.u32 1.1754944e-38, %v815
  %v817 = vsel %vm814, %v816, %v812
  %v818 = vmul.f32 1.0, %v817
  %v819 = vtanh.pop %v799
  %v820 = vmul.f32 %v818, 0.0
  %822 = vrot.lane.b32.xlu0 %v819, 32
  %v823 = vpop.permute.xlu0 %822
  %v825 = vmul.f32 %v818, %v823
  %827 = vrot.lane.b32.xlu0 %v825, 32
  %v828 = vpop.permute.xlu0 %827
  %v830 = vadd.f32 %v820, %v828
  %v831 = vtanh.pop %v830
  %833 = vrot.lane.b32.xlu0 %v831, 32
  %v834 = vpop.permute.xlu0 %833
  %v836 = vmul.f32 %v818, %v834
  %838 = vrot.lane.b32.xlu0 %v836, 64
  %v839 = vpop.permute.xlu0 %838
  %841 = vst.msk [vmem:[#allocation3] sm:$0xff] %vm166, %v839
  %v842 = vld [vmem:[%s226] sm:$0xff]
  %v843 = vpack.c.bf16 %v836, %v836
  %845 = vrot.lane.b32.xlu0 %v843, 64
  %v846 = vpop.permute.xlu0 %845
  %v848 = vsel %vm166, %v846, 0
  %850 = vmatpush.bf16.msra.mxu0 0
  %851 = vmatpush.bf16.msra.mxu0 0
  %852 = vmatpush.bf16.msra.mxu0 0
  %853 = vmatpush.bf16.msra.mxu0 0
  %854 = vmatpush.bf16.msra.mxu0 0
  %855 = vmatpush.bf16.msra.mxu0 0
  %856 = vmatpush.bf16.msra.mxu0 %v783
  %857 = vmatpush.bf16.msra.mxu0 %v782
  %858 = vmatmul.bf16.gmra.mxu0 %v848
  %v859 = vpop.f32.mrf.mxu0
  %v860 = vadd.f32 0.0, %v859
  %v861 = vpop.f32.mrf.mxu0
  %862 = vdwg.mxu0
  %v863 = vadd.f32 %v842, %v860
  %v864 = vxor.u32 %v863, 2147483648
  %v865 = vmul.f32 %v864, 1.442695
  %v866 = vpow.pop %v865
  %v867 = vadd.f32 %v866, 1.0
  %v868 = vrcp.pop %v867
  %v869 = vmul.f32 %v867, %v868
  %v870 = vsub.f32 1.0, %v869
  %v871 = vmul.f32 %v868, %v870
  %v872 = vadd.f32 %v868, %v871
  %vm873 = vweird.f32 %v867
  %vm874 = vweird.f32 %v868
  %vm875 = vmor %vm873, %vm874
  %v876 = vsel %vm875, %v868, %v872
  %v877 = vand.u32 2147483647, %v867
  %vm878 = vcmp.eq.f32.partialorder %v877, 8.507059e+37
  %v879 = vand.u32 %v867, 2147483648
  %v880 = vor.u32 1.1754944e-38, %v879
  %v881 = vsel %vm878, %v880, %v876
  %v882 = vmul.f32 1.0, %v881
  %v883 = vtanh.pop %v863
  %v884 = vmul.f32 %v882, %v830
  %886 = vrot.lane.b32.xlu0 %v883, 32
  %v887 = vpop.permute.xlu0 %886
  %v889 = vmul.f32 %v882, %v887
  %891 = vrot.lane.b32.xlu0 %v889, 32
  %v892 = vpop.permute.xlu0 %891
  %v894 = vadd.f32 %v884, %v892
  %v895 = vtanh.pop %v894
  %897 = vrot.lane.b32.xlu0 %v895, 32
  %v898 = vpop.permute.xlu0 %897
  %v900 = vmul.f32 %v882, %v898
  %902 = vrot.lane.b32.xlu0 %v900, 64
  %v903 = vpop.permute.xlu0 %902
  %905 = vst.msk [vmem:[%s290] sm:$0xff] %vm166, %v903
  %v906 = vld [vmem:[%s292] sm:$0xff]
  %v907 = vpack.c.bf16 %v900, %v900
  %909 = vrot.lane.b32.xlu0 %v907, 64
  %v910 = vpop.permute.xlu0 %909
  %v912 = vsel %vm166, %v910, 0
  %914 = vmatpush.bf16.msra.mxu0 0
  %915 = vmatpush.bf16.msra.mxu0 0
  %916 = vmatpush.bf16.msra.mxu0 0
  %917 = vmatpush.bf16.msra.mxu0 0
  %918 = vmatpush.bf16.msra.mxu0 0
  %919 = vmatpush.bf16.msra.mxu0 0
  %920 = vmatpush.bf16.msra.mxu0 %v783
  %921 = vmatpush.bf16.msra.mxu0 %v782
  %922 = vmatmul.bf16.gmra.mxu0 %v912
  %v923 = vpop.f32.mrf.mxu0
  %v924 = vadd.f32 0.0, %v923
  %v925 = vpop.f32.mrf.mxu0
  %926 = vdwg.mxu0
  %v927 = vadd.f32 %v906, %v924
  %v928 = vxor.u32 %v927, 2147483648
  %v929 = vmul.f32 %v928, 1.442695
  %v930 = vpow.pop %v929
  %v931 = vadd.f32 %v930, 1.0
  %v932 = vrcp.pop %v931
  %v933 = vmul.f32 %v931, %v932
  %v934 = vsub.f32 1.0, %v933
  %v935 = vmul.f32 %v932, %v934
  %v936 = vadd.f32 %v932, %v935
  %vm937 = vweird.f32 %v931
  %vm938 = vweird.f32 %v932
  %vm939 = vmor %vm937, %vm938
  %v940 = vsel %vm939, %v932, %v936
  %v941 = vand.u32 2147483647, %v931
  %vm942 = vcmp.eq.f32.partialorder %v941, 8.507059e+37
  %v943 = vand.u32 %v931, 2147483648
  %v944 = vor.u32 1.1754944e-38, %v943
  %v945 = vsel %vm942, %v944, %v940
  %v946 = vmul.f32 1.0, %v945
  %v947 = vtanh.pop %v927
  %v948 = vmul.f32 %v946, %v894
  %950 = vrot.lane.b32.xlu0 %v947, 32
  %v951 = vpop.permute.xlu0 %950
  %v953 = vmul.f32 %v946, %v951
  %955 = vrot.lane.b32.xlu0 %v953, 32
  %v956 = vpop.permute.xlu0 %955
  %v958 = vadd.f32 %v948, %v956
  %v959 = vtanh.pop %v958
  %961 = vrot.lane.b32.xlu0 %v959, 32
  %v962 = vpop.permute.xlu0 %961
  %v964 = vmul.f32 %v946, %v962
  %966 = vrot.lane.b32.xlu0 %v964, 64
  %v967 = vpop.permute.xlu0 %966
  %969 = vst.msk [vmem:[%s356] sm:$0xff] %vm166, %v967
  %v970 = vld [vmem:[%s358] sm:$0xff]
  %v971 = vpack.c.bf16 %v964, %v964
  %973 = vrot.lane.b32.xlu0 %v971, 64
  %v974 = vpop.permute.xlu0 %973
  %v976 = vsel %vm166, %v974, 0
  %978 = vmatpush.bf16.msra.mxu0 0
  %979 = vmatpush.bf16.msra.mxu0 0
  %980 = vmatpush.bf16.msra.mxu0 0
  %981 = vmatpush.bf16.msra.mxu0 0
  %982 = vmatpush.bf16.msra.mxu0 0
  %983 = vmatpush.bf16.msra.mxu0 0
  %984 = vmatpush.bf16.msra.mxu0 %v783
  %985 = vmatpush.bf16.msra.mxu0 %v782
  %986 = vmatmul.bf16.gmra.mxu0 %v976
  %v987 = vpop.f32.mrf.mxu0
  %v988 = vadd.f32 0.0, %v987
  %v989 = vpop.f32.mrf.mxu0
  %990 = vdwg.mxu0
  %v991 = vadd.f32 %v970, %v988
  %v992 = vxor.u32 %v991, 2147483648
  %v993 = vmul.f32 %v992, 1.442695
  %v994 = vpow.pop %v993
  %v995 = vadd.f32 %v994, 1.0
  %v996 = vrcp.pop %v995
  %v997 = vmul.f32 %v995, %v996
  %v998 = vsub.f32 1.0, %v997
  %v999 = vmul.f32 %v996, %v998
  %v1000 = vadd.f32 %v996, %v999
  %vm1001 = vweird.f32 %v995
  %vm1002 = vweird.f32 %v996
  %vm1003 = vmor %vm1001, %vm1002
  %v1004 = vsel %vm1003, %v996, %v1000
  %v1005 = vand.u32 2147483647, %v995
  %vm1006 = vcmp.eq.f32.partialorder %v1005, 8.507059e+37
  %v1007 = vand.u32 %v995, 2147483648
  %v1008 = vor.u32 1.1754944e-38, %v1007
  %v1009 = vsel %vm1006, %v1008, %v1004
  %v1010 = vmul.f32 1.0, %v1009
  %v1011 = vtanh.pop %v991
  %v1012 = vmul.f32 %v1010, %v958
  %1014 = vrot.lane.b32.xlu0 %v1011, 32
  %v1015 = vpop.permute.xlu0 %1014
  %v1017 = vmul.f32 %v1010, %v1015
  %1019 = vrot.lane.b32.xlu0 %v1017, 32
  %v1020 = vpop.permute.xlu0 %1019
  %v1022 = vadd.f32 %v1012, %v1020
  %v1023 = vtanh.pop %v1022
  %1025 = vrot.lane.b32.xlu0 %v1023, 32
  %v1026 = vpop.permute.xlu0 %1025
  %v1028 = vmul.f32 %v1010, %v1026
  %1030 = vrot.lane.b32.xlu0 %v1028, 64
  %v1031 = vpop.permute.xlu0 %1030
  %1033 = vst.msk [vmem:[%s422] sm:$0xff] %vm166, %v1031
  %v1034 = vld [vmem:[%s424] sm:$0xff]
  %v1035 = vpack.c.bf16 %v1028, %v1028
  %1037 = vrot.lane.b32.xlu0 %v1035, 64
  %v1038 = vpop.permute.xlu0 %1037
  %v1040 = vsel %vm166, %v1038, 0
  %1042 = vmatpush.bf16.msra.mxu0 0
  %1043 = vmatpush.bf16.msra.mxu0 0
  %1044 = vmatpush.bf16.msra.mxu0 0
  %1045 = vmatpush.bf16.msra.mxu0 0
  %1046 = vmatpush.bf16.msra.mxu0 0
  %1047 = vmatpush.bf16.msra.mxu0 0
  %1048 = vmatpush.bf16.msra.mxu0 %v783
  %1049 = vmatpush.bf16.msra.mxu0 %v782
  %1050 = vmatmul.bf16.gmra.mxu0 %v1040
  %v1051 = vpop.f32.mrf.mxu0
  %v1052 = vadd.f32 0.0, %v1051
  %v1053 = vpop.f32.mrf.mxu0
  %1054 = vdwg.mxu0
  %v1055 = vadd.f32 %v1034, %v1052
  %v1056 = vxor.u32 %v1055, 2147483648
  %v1057 = vmul.f32 %v1056, 1.442695
  %v1058 = vpow.pop %v1057
  %v1059 = vadd.f32 %v1058, 1.0
  %v1060 = vrcp.pop %v1059
  %v1061 = vmul.f32 %v1059, %v1060
  %v1062 = vsub.f32 1.0, %v1061
  %v1063 = vmul.f32 %v1060, %v1062
  %v1064 = vadd.f32 %v1060, %v1063
  %vm1065 = vweird.f32 %v1059
  %vm1066 = vweird.f32 %v1060
  %vm1067 = vmor %vm1065, %vm1066
  %v1068 = vsel %vm1067, %v1060, %v1064
  %v1069 = vand.u32 2147483647, %v1059
  %vm1070 = vcmp.eq.f32.partialorder %v1069, 8.507059e+37
  %v1071 = vand.u32 %v1059, 2147483648
  %v1072 = vor.u32 1.1754944e-38, %v1071
  %v1073 = vsel %vm1070, %v1072, %v1068
  %v1074 = vmul.f32 1.0, %v1073
  %v1075 = vtanh.pop %v1055
  %v1076 = vmul.f32 %v1074, %v1022
  %1078 = vrot.lane.b32.xlu0 %v1075, 32
  %v1079 = vpop.permute.xlu0 %1078
  %v1081 = vmul.f32 %v1074, %v1079
  %1083 = vrot.lane.b32.xlu0 %v1081, 32
  %v1084 = vpop.permute.xlu0 %1083
  %v1086 = vadd.f32 %v1076, %v1084
  %v1087 = vtanh.pop %v1086
  %1089 = vrot.lane.b32.xlu0 %v1087, 32
  %v1090 = vpop.permute.xlu0 %1089
  %v1092 = vmul.f32 %v1074, %v1090
  %1094 = vrot.lane.b32.xlu0 %v1092, 64
  %v1095 = vpop.permute.xlu0 %1094
  %1097 = vst.msk [vmem:[%s488] sm:$0xff] %vm166, %v1095
  %v1098 = vld [vmem:[%s490] sm:$0xff]
  %v1099 = vpack.c.bf16 %v1092, %v1092
  %1101 = vrot.lane.b32.xlu0 %v1099, 64
  %v1102 = vpop.permute.xlu0 %1101
  %v1104 = vsel %vm166, %v1102, 0
  %1106 = vmatpush.bf16.msra.mxu0 0
  %1107 = vmatpush.bf16.msra.mxu0 0
  %1108 = vmatpush.bf16.msra.mxu0 0
  %1109 = vmatpush.bf16.msra.mxu0 0
  %1110 = vmatpush.bf16.msra.mxu0 0
  %1111 = vmatpush.bf16.msra.mxu0 0
  %1112 = vmatpush.bf16.msra.mxu0 %v783
  %1113 = vmatpush.bf16.msra.mxu0 %v782
  %1114 = vmatmul.bf16.gmra.mxu0 %v1104
  %v1115 = vpop.f32.mrf.mxu0
  %v1116 = vadd.f32 0.0, %v1115
  %v1117 = vpop.f32.mrf.mxu0
  %1118 = vdwg.mxu0
  %v1119 = vadd.f32 %v1098, %v1116
  %v1120 = vxor.u32 %v1119, 2147483648
  %v1121 = vmul.f32 %v1120, 1.442695
  %v1122 = vpow.pop %v1121
  %v1123 = vadd.f32 %v1122, 1.0
  %v1124 = vrcp.pop %v1123
  %v1125 = vmul.f32 %v1123, %v1124
  %v1126 = vsub.f32 1.0, %v1125
  %v1127 = vmul.f32 %v1124, %v1126
  %v1128 = vadd.f32 %v1124, %v1127
  %vm1129 = vweird.f32 %v1123
  %vm1130 = vweird.f32 %v1124
  %vm1131 = vmor %vm1129, %vm1130
  %v1132 = vsel %vm1131, %v1124, %v1128
  %v1133 = vand.u32 2147483647, %v1123
  %vm1134 = vcmp.eq.f32.partialorder %v1133, 8.507059e+37
  %v1135 = vand.u32 %v1123, 2147483648
  %v1136 = vor.u32 1.1754944e-38, %v1135
  %v1137 = vsel %vm1134, %v1136, %v1132
  %v1138 = vmul.f32 1.0, %v1137
  %v1139 = vtanh.pop %v1119
  %v1140 = vmul.f32 %v1138, %v1086
  %1142 = vrot.lane.b32.xlu0 %v1139, 32
  %v1143 = vpop.permute.xlu0 %1142
  %v1145 = vmul.f32 %v1138, %v1143
  %1147 = vrot.lane.b32.xlu0 %v1145, 32
  %v1148 = vpop.permute.xlu0 %1147
  %v1150 = vadd.f32 %v1140, %v1148
  %v1151 = vtanh.pop %v1150
  %1153 = vrot.lane.b32.xlu0 %v1151, 32
  %v1154 = vpop.permute.xlu0 %1153
  %v1156 = vmul.f32 %v1138, %v1154
  %1158 = vrot.lane.b32.xlu0 %v1156, 64
  %v1159 = vpop.permute.xlu0 %1158
  %1161 = vst.msk [vmem:[%s554] sm:$0xff] %vm166, %v1159
  %v1162 = vld [vmem:[%s556] sm:$0xff]
  %v1163 = vpack.c.bf16 %v1156, %v1156
  %1165 = vrot.lane.b32.xlu0 %v1163, 64
  %v1166 = vpop.permute.xlu0 %1165
  %v1168 = vsel %vm166, %v1166, 0
  %1170 = vmatpush.bf16.msra.mxu0 0
  %1171 = vmatpush.bf16.msra.mxu0 0
  %1172 = vmatpush.bf16.msra.mxu0 0
  %1173 = vmatpush.bf16.msra.mxu0 0
  %1174 = vmatpush.bf16.msra.mxu0 0
  %1175 = vmatpush.bf16.msra.mxu0 0
  %1176 = vmatpush.bf16.msra.mxu0 %v783
  %1177 = vmatpush.bf16.msra.mxu0 %v782
  %1178 = vmatmul.bf16.gmra.mxu0 %v1168
  %v1179 = vpop.f32.mrf.mxu0
  %v1180 = vadd.f32 0.0, %v1179
  %v1181 = vpop.f32.mrf.mxu0
  %1182 = vdwg.mxu0
  %v1183 = vadd.f32 %v1162, %v1180
  %v1184 = vxor.u32 %v1183, 2147483648
  %v1185 = vmul.f32 %v1184, 1.442695
  %v1186 = vpow.pop %v1185
  %v1187 = vadd.f32 %v1186, 1.0
  %v1188 = vrcp.pop %v1187
  %v1189 = vmul.f32 %v1187, %v1188
  %v1190 = vsub.f32 1.0, %v1189
  %v1191 = vmul.f32 %v1188, %v1190
  %v1192 = vadd.f32 %v1188, %v1191
  %vm1193 = vweird.f32 %v1187
  %vm1194 = vweird.f32 %v1188
  %vm1195 = vmor %vm1193, %vm1194
  %v1196 = vsel %vm1195, %v1188, %v1192
  %v1197 = vand.u32 2147483647, %v1187
  %vm1198 = vcmp.eq.f32.partialorder %v1197, 8.507059e+37
  %v1199 = vand.u32 %v1187, 2147483648
  %v1200 = vor.u32 1.1754944e-38, %v1199
  %v1201 = vsel %vm1198, %v1200, %v1196
  %v1202 = vmul.f32 1.0, %v1201
  %v1203 = vtanh.pop %v1183
  %v1204 = vmul.f32 %v1202, %v1150
  %1206 = vrot.lane.b32.xlu0 %v1203, 32
  %v1207 = vpop.permute.xlu0 %1206
  %v1209 = vmul.f32 %v1202, %v1207
  %1211 = vrot.lane.b32.xlu0 %v1209, 32
  %v1212 = vpop.permute.xlu0 %1211
  %v1214 = vadd.f32 %v1204, %v1212
  %v1215 = vtanh.pop %v1214
  %1217 = vrot.lane.b32.xlu0 %v1215, 32
  %v1218 = vpop.permute.xlu0 %1217
  %v1220 = vmul.f32 %v1202, %v1218
  %1222 = vrot.lane.b32.xlu0 %v1220, 64
  %v1223 = vpop.permute.xlu0 %1222
  %1225 = vst.msk [vmem:[%s620] sm:$0xff] %vm166, %v1223
  %v1226 = vld [vmem:[%s622] sm:$0xff]
  %v1227 = vpack.c.bf16 %v1220, %v1220
  %1229 = vrot.lane.b32.xlu0 %v1227, 64
  %v1230 = vpop.permute.xlu0 %1229
  %v1232 = vsel %vm166, %v1230, 0
  %1234 = vmatpush.bf16.msra.mxu0 0
  %1235 = vmatpush.bf16.msra.mxu0 0
  %1236 = vmatpush.bf16.msra.mxu0 0
  %1237 = vmatpush.bf16.msra.mxu0 0
  %1238 = vmatpush.bf16.msra.mxu0 0
  %1239 = vmatpush.bf16.msra.mxu0 0
  %1240 = vmatpush.bf16.msra.mxu0 %v783
  %1241 = vmatpush.bf16.msra.mxu0 %v782
  %1242 = vmatmul.bf16.gmra.mxu0 %v1232
  %v1243 = vpop.f32.mrf.mxu0
  %v1244 = vadd.f32 0.0, %v1243
  %v1245 = vpop.f32.mrf.mxu0
  %1246 = vdwg.mxu0
  %v1247 = vadd.f32 %v1226, %v1244
  %v1248 = vxor.u32 %v1247, 2147483648
  %v1249 = vmul.f32 %v1248, 1.442695
  %v1250 = vpow.pop %v1249
  %v1251 = vadd.f32 %v1250, 1.0
  %v1252 = vrcp.pop %v1251
  %v1253 = vmul.f32 %v1251, %v1252
  %v1254 = vsub.f32 1.0, %v1253
  %v1255 = vmul.f32 %v1252, %v1254
  %v1256 = vadd.f32 %v1252, %v1255
  %vm1257 = vweird.f32 %v1251
  %vm1258 = vweird.f32 %v1252
  %vm1259 = vmor %vm1257, %vm1258
  %v1260 = vsel %vm1259, %v1252, %v1256
  %v1261 = vand.u32 2147483647, %v1251
  %vm1262 = vcmp.eq.f32.partialorder %v1261, 8.507059e+37
  %v1263 = vand.u32 %v1251, 2147483648
  %v1264 = vor.u32 1.1754944e-38, %v1263
  %v1265 = vsel %vm1262, %v1264, %v1260
  %v1266 = vmul.f32 1.0, %v1265
  %v1267 = vtanh.pop %v1247
  %v1268 = vmul.f32 %v1266, %v1214
  %1270 = vrot.lane.b32.xlu0 %v1267, 32
  %v1271 = vpop.permute.xlu0 %1270
  %v1273 = vmul.f32 %v1266, %v1271
  %1275 = vrot.lane.b32.xlu0 %v1273, 32
  %v1276 = vpop.permute.xlu0 %1275
  %v1278 = vadd.f32 %v1268, %v1276
  %v1279 = vtanh.pop %v1278
  %1281 = vrot.lane.b32.xlu0 %v1279, 32
  %v1282 = vpop.permute.xlu0 %1281
  %v1284 = vmul.f32 %v1266, %v1282
  %1286 = vrot.lane.b32.xlu0 %v1284, 64
  %v1287 = vpop.permute.xlu0 %1286
  %1289 = vst.msk [vmem:[%s686] sm:$0xff] %vm166, %v1287
  %v1290 = vld [vmem:[#allocation3] sm:$0xff]
  %v1291 = vld [vmem:[#allocation3 + $0x8] sm:$0xff]
  %v1292 = vld [vmem:[#allocation3 + $0x10] sm:$0xff]
  %v1293 = vld [vmem:[#allocation3 + $0x18] sm:$0xff]
  %v1294 = vld [vmem:[#allocation3 + $0x20] sm:$0xff]
  %v1295 = vld [vmem:[#allocation3 + $0x28] sm:$0xff]
  %v1296 = vld [vmem:[#allocation3 + $0x30] sm:$0xff]
  %v1297 = vld [vmem:[#allocation3 + $0x38] sm:$0xff]
  %v1298 = vsel %vm166, %v1290, 0.0
  %1299 = vadd.xlane.f32.xlu0 %v1298
  %v1300 = vpop.xlane.xlu0 %1299
  %v1301 = vsel %vm166, %v1291, 0.0
  %1302 = vadd.xlane.f32.xlu0 %v1301
  %v1303 = vpop.xlane.xlu0 %1302
  %v1304 = vsel %vm166, %v1292, 0.0
  %1305 = vadd.xlane.f32.xlu0 %v1304
  %v1306 = vpop.xlane.xlu0 %1305
  %v1307 = vsel %vm166, %v1293, 0.0
  %1308 = vadd.xlane.f32.xlu0 %v1307
  %v1309 = vpop.xlane.xlu0 %1308
  %v1310 = vsel %vm166, %v1294, 0.0
  %1311 = vadd.xlane.f32.xlu0 %v1310
  %v1312 = vpop.xlane.xlu0 %1311
  %v1313 = vsel %vm166, %v1295, 0.0
  %1314 = vadd.xlane.f32.xlu0 %v1313
  %v1315 = vpop.xlane.xlu0 %1314
  %v1316 = vsel %vm166, %v1296, 0.0
  %1317 = vadd.xlane.f32.xlu0 %v1316
  %v1318 = vpop.xlane.xlu0 %1317
  %v1319 = vsel %vm166, %v1297, 0.0
  %1320 = vadd.xlane.f32.xlu0 %v1319
  %v1321 = vpop.xlane.xlu0 %1320
  %v1322 = vrcp.pop 32.0
  %v1323 = vmul.f32 32.0, %v1322
  %v1324 = vsub.f32 1.0, %v1323
  %v1325 = vmul.f32 %v1322, %v1324
  %v1326 = vadd.f32 %v1322, %v1325
  %vm1327 = vweird.f32 %v1322
  %v1328 = vsel %vm1327, %v1322, %v1326
  %v1329 = vmul.f32 %v1300, %v1328
  %v1330 = vmul.f32 %v1303, %v1328
  %v1331 = vmul.f32 %v1306, %v1328
  %v1332 = vmul.f32 %v1309, %v1328
  %v1333 = vmul.f32 %v1312, %v1328
  %v1334 = vmul.f32 %v1315, %v1328
  %v1335 = vmul.f32 %v1318, %v1328
  %v1336 = vmul.f32 %v1321, %v1328
  %v1337 = vsub.f32 %v1290, %v1329
  %v1338 = vsub.f32 %v1291, %v1330
  %v1339 = vsub.f32 %v1292, %v1331
  %v1340 = vsub.f32 %v1293, %v1332
  %v1341 = vsub.f32 %v1294, %v1333
  %v1342 = vsub.f32 %v1295, %v1334
  %v1343 = vsub.f32 %v1296, %v1335
  %v1344 = vsub.f32 %v1297, %v1336
  %v1345 = vmul.f32 %v1337, %v1337
  %v1346 = vmul.f32 %v1338, %v1338
  %v1347 = vmul.f32 %v1339, %v1339
  %v1348 = vmul.f32 %v1340, %v1340
  %v1349 = vmul.f32 %v1341, %v1341
  %v1350 = vmul.f32 %v1342, %v1342
  %v1351 = vmul.f32 %v1343, %v1343
  %v1352 = vmul.f32 %v1344, %v1344
  %v1353 = vsel %vm166, %v1345, 0.0
  %1354 = vadd.xlane.f32.xlu0 %v1353
  %v1355 = vpop.xlane.xlu0 %1354
  %v1356 = vsel %vm166, %v1346, 0.0
  %1357 = vadd.xlane.f32.xlu0 %v1356
  %v1358 = vpop.xlane.xlu0 %1357
  %v1359 = vsel %vm166, %v1347, 0.0
  %1360 = vadd.xlane.f32.xlu0 %v1359
  %v1361 = vpop.xlane.xlu0 %1360
  %v1362 = vsel %vm166, %v1348, 0.0
  %1363 = vadd.xlane.f32.xlu0 %v1362
  %v1364 = vpop.xlane.xlu0 %1363
  %v1365 = vsel %vm166, %v1349, 0.0
  %1366 = vadd.xlane.f32.xlu0 %v1365
  %v1367 = vpop.xlane.xlu0 %1366
  %v1368 = vsel %vm166, %v1350, 0.0
  %1369 = vadd.xlane.f32.xlu0 %v1368
  %v1370 = vpop.xlane.xlu0 %1369
  %v1371 = vsel %vm166, %v1351, 0.0
  %1372 = vadd.xlane.f32.xlu0 %v1371
  %v1373 = vpop.xlane.xlu0 %1372
  %v1374 = vsel %vm166, %v1352, 0.0
  %1375 = vadd.xlane.f32.xlu0 %v1374
  %v1376 = vpop.xlane.xlu0 %1375
  %v1377 = vmul.f32 %v1355, %v1328
  %v1378 = vmul.f32 %v1358, %v1328
  %v1379 = vmul.f32 %v1361, %v1328
  %v1380 = vmul.f32 %v1364, %v1328
  %v1381 = vmul.f32 %v1367, %v1328
  %v1382 = vmul.f32 %v1370, %v1328
  %v1383 = vmul.f32 %v1373, %v1328
  %v1384 = vmul.f32 %v1376, %v1328
  %v1385 = vadd.f32 %v1377, 1e-05
  %v1386 = vadd.f32 %v1378, 1e-05
  %v1387 = vadd.f32 %v1379, 1e-05
  %v1388 = vadd.f32 %v1380, 1e-05
  %v1389 = vadd.f32 %v1381, 1e-05
  %v1390 = vadd.f32 %v1382, 1e-05
  %v1391 = vadd.f32 %v1383, 1e-05
  %v1392 = vadd.f32 %v1384, 1e-05
  %v1393 = vrsqrt.pop %v1385
  %v1394 = vmul.f32 %v1393, %v1385
  %v1395 = vmul.f32 %v1394, %v1393
  %v1396 = vmul.f32 0.5, %v1395
  %v1397 = vsub.f32 1.5, %v1396
  %v1398 = vmul.f32 %v1393, %v1397
  %vm1399 = vweird.f32 %v1385
  %vm1400 = vweird.f32 %v1393
  %vm1401 = vmor %vm1399, %vm1400
  %v1402 = vsel %vm1401, %v1393, %v1398
  %v1403 = vrsqrt.pop %v1386
  %v1404 = vmul.f32 %v1403, %v1386
  %v1405 = vmul.f32 %v1404, %v1403
  %v1406 = vmul.f32 0.5, %v1405
  %v1407 = vsub.f32 1.5, %v1406
  %v1408 = vmul.f32 %v1403, %v1407
  %vm1409 = vweird.f32 %v1386
  %vm1410 = vweird.f32 %v1403
  %vm1411 = vmor %vm1409, %vm1410
  %v1412 = vsel %vm1411, %v1403, %v1408
  %v1413 = vrsqrt.pop %v1387
  %v1414 = vmul.f32 %v1413, %v1387
  %v1415 = vmul.f32 %v1414, %v1413
  %v1416 = vmul.f32 0.5, %v1415
  %v1417 = vsub.f32 1.5, %v1416
  %v1418 = vmul.f32 %v1413, %v1417
  %vm1419 = vweird.f32 %v1387
  %vm1420 = vweird.f32 %v1413
  %vm1421 = vmor %vm1419, %vm1420
  %v1422 = vsel %vm1421, %v1413, %v1418
  %v1423 = vrsqrt.pop %v1388
  %v1424 = vmul.f32 %v1423, %v1388
  %v1425 = vmul.f32 %v1424, %v1423
  %v1426 = vmul.f32 0.5, %v1425
  %v1427 = vsub.f32 1.5, %v1426
  %v1428 = vmul.f32 %v1423, %v1427
  %vm1429 = vweird.f32 %v1388
  %vm1430 = vweird.f32 %v1423
  %vm1431 = vmor %vm1429, %vm1430
  %v1432 = vsel %vm1431, %v1423, %v1428
  %v1433 = vrsqrt.pop %v1389
  %v1434 = vmul.f32 %v1433, %v1389
  %v1435 = vmul.f32 %v1434, %v1433
  %v1436 = vmul.f32 0.5, %v1435
  %v1437 = vsub.f32 1.5, %v1436
  %v1438 = vmul.f32 %v1433, %v1437
  %vm1439 = vweird.f32 %v1389
  %vm1440 = vweird.f32 %v1433
  %vm1441 = vmor %vm1439, %vm1440
  %v1442 = vsel %vm1441, %v1433, %v1438
  %v1443 = vrsqrt.pop %v1390
  %v1444 = vmul.f32 %v1443, %v1390
  %v1445 = vmul.f32 %v1444, %v1443
  %v1446 = vmul.f32 0.5, %v1445
  %v1447 = vsub.f32 1.5, %v1446
  %v1448 = vmul.f32 %v1443, %v1447
  %vm1449 = vweird.f32 %v1390
  %vm1450 = vweird.f32 %v1443
  %vm1451 = vmor %vm1449, %vm1450
  %v1452 = vsel %vm1451, %v1443, %v1448
  %v1453 = vrsqrt.pop %v1391
  %v1454 = vmul.f32 %v1453, %v1391
  %v1455 = vmul.f32 %v1454, %v1453
  %v1456 = vmul.f32 0.5, %v1455
  %v1457 = vsub.f32 1.5, %v1456
  %v1458 = vmul.f32 %v1453, %v1457
  %vm1459 = vweird.f32 %v1391
  %vm1460 = vweird.f32 %v1453
  %vm1461 = vmor %vm1459, %vm1460
  %v1462 = vsel %vm1461, %v1453, %v1458
  %v1463 = vrsqrt.pop %v1392
  %v1464 = vmul.f32 %v1463, %v1392
  %v1465 = vmul.f32 %v1464, %v1463
  %v1466 = vmul.f32 0.5, %v1465
  %v1467 = vsub.f32 1.5, %v1466
  %v1468 = vmul.f32 %v1463, %v1467
  %vm1469 = vweird.f32 %v1392
  %vm1470 = vweird.f32 %v1463
  %vm1471 = vmor %vm1469, %vm1470
  %v1472 = vsel %vm1471, %v1463, %v1468
  %v1473 = vmul.f32 %v1337, %v1402
  %v1474 = vmul.f32 %v1338, %v1412
  %v1475 = vmul.f32 %v1339, %v1422
  %v1476 = vmul.f32 %v1340, %v1432
  %v1477 = vmul.f32 %v1341, %v1442
  %v1478 = vmul.f32 %v1342, %v1452
  %v1479 = vmul.f32 %v1343, %v1462
  %v1480 = vmul.f32 %v1344, %v1472
  %v1481 = vld [vmem:[%s7] sm:$0x1]
  %v1483 = vperm.slane %v1481, 0
  %v1485 = vmul.f32 %v1473, %v1483
  %v1486 = vmul.f32 %v1474, %v1483
  %v1487 = vmul.f32 %v1475, %v1483
  %v1488 = vmul.f32 %v1476, %v1483
  %v1489 = vmul.f32 %v1477, %v1483
  %v1490 = vmul.f32 %v1478, %v1483
  %v1491 = vmul.f32 %v1479, %v1483
  %v1492 = vmul.f32 %v1480, %v1483
  %v1493 = vld [vmem:[%s8] sm:$0x1]
  %v1495 = vperm.slane %v1493, 0
  %v1497 = vadd.f32 %v1485, %v1495
  %v1498 = vadd.f32 %v1486, %v1495
  %v1499 = vadd.f32 %v1487, %v1495
  %v1500 = vadd.f32 %v1488, %v1495
  %v1501 = vadd.f32 %v1489, %v1495
  %v1502 = vadd.f32 %v1490, %v1495
  %v1503 = vadd.f32 %v1491, %v1495
  %v1504 = vadd.f32 %v1492, %v1495
  %v1505 = vpack.c.bf16 %v1498, %v1497
  %v1506 = vpack.c.bf16 %v1500, %v1499
  %v1507 = vpack.c.bf16 %v1502, %v1501
  %v1508 = vpack.c.bf16 %v1504, %v1503
  %v1509 = vld [vmem:[%s9] sm:$0xff]
  %v1510 = vld [vmem:[%s9 + $0x8] sm:$0xff]
  %v1511 = vld [vmem:[%s9 + $0x10] sm:$0xff]
  %v1512 = vld [vmem:[%s9 + $0x18] sm:$0xff]
  %v1513 = vld [vmem:[%s10] sm:$0x3]
  %v1515 = vperm.slane %v1513, 0
  %v1516 = vperm.slane %v1513, 1
  %v1523 = vunpack.c.l.b16 %v1509
  %v1524 = vunpack.c.h.b16 %v1509
  %v1525 = vunpack.c.l.b16 %v1510
  %v1526 = vunpack.c.h.b16 %v1510
  %v1527 = vunpack.c.l.b16 %v1511
  %v1528 = vunpack.c.h.b16 %v1511
  %v1529 = vunpack.c.l.b16 %v1512
  %v1530 = vunpack.c.h.b16 %v1512
  %v1531 = vpack.c.b16 %v1525, %v1523
  %v1532 = vpack.c.b16 %v1526, %v1524
  %v1533 = vpack.c.b16 %v1529, %v1527
  %v1534 = vpack.c.b16 %v1530, %v1528
  %v1540 = vsel %vm166, %v1505, 0
  %v1543 = vsel %vm166, %v1506, 0
  %v1546 = vsel %vm166, %v1507, 0
  %v1549 = vsel %vm166, %v1508, 0
  %1551 = vmatpush.bf16.msra.mxu0 0
  %1552 = vmatpush.bf16.msra.mxu0 0
  %1553 = vmatpush.bf16.msra.mxu0 0
  %1554 = vmatpush.bf16.msra.mxu0 0
  %1555 = vmatpush.bf16.msra.mxu0 0
  %1556 = vmatpush.bf16.msra.mxu0 0
  %1557 = vmatpush.bf16.msra.mxu0 %v1533
  %1558 = vmatpush.bf16.msra.mxu0 %v1531
  %1559 = vmatmul.bf16.gmra.mxu0 %v1540
  %v1560 = vpop.f32.mrf.mxu0
  %v1561 = vadd.f32 %v1515, %v1560
  %v1562 = vpop.f32.mrf.mxu0
  %v1563 = vadd.f32 %v1515, %v1562
  %1564 = vmatmul.bf16.gmra.mxu0 %v1543
  %v1565 = vpop.f32.mrf.mxu0
  %v1566 = vadd.f32 %v1515, %v1565
  %v1567 = vpop.f32.mrf.mxu0
  %v1568 = vadd.f32 %v1515, %v1567
  %1569 = vmatmul.bf16.gmra.mxu0 %v1546
  %v1570 = vpop.f32.mrf.mxu0
  %v1571 = vadd.f32 %v1515, %v1570
  %v1572 = vpop.f32.mrf.mxu0
  %v1573 = vadd.f32 %v1515, %v1572
  %1574 = vmatmul.bf16.gmra.mxu0 %v1549
  %v1575 = vpop.f32.mrf.mxu0
  %v1576 = vadd.f32 %v1515, %v1575
  %v1577 = vpop.f32.mrf.mxu0
  %v1578 = vadd.f32 %v1515, %v1577
  %1579 = vdwg.mxu0
  %1580 = vmatpush.bf16.msra.mxu0 0
  %1581 = vmatpush.bf16.msra.mxu0 0
  %1582 = vmatpush.bf16.msra.mxu0 0
  %1583 = vmatpush.bf16.msra.mxu0 0
  %1584 = vmatpush.bf16.msra.mxu0 0
  %1585 = vmatpush.bf16.msra.mxu0 0
  %1586 = vmatpush.bf16.msra.mxu0 %v1534
  %1587 = vmatpush.bf16.msra.mxu0 %v1532
  %1588 = vmatmul.bf16.gmra.mxu0 %v1540
  %v1589 = vpop.f32.mrf.mxu0
  %v1590 = vadd.f32 %v1516, %v1589
  %v1591 = vpop.f32.mrf.mxu0
  %v1592 = vadd.f32 %v1516, %v1591
  %1593 = vmatmul.bf16.gmra.mxu0 %v1543
  %v1594 = vpop.f32.mrf.mxu0
  %v1595 = vadd.f32 %v1516, %v1594
  %v1596 = vpop.f32.mrf.mxu0
  %v1597 = vadd.f32 %v1516, %v1596
  %1598 = vmatmul.bf16.gmra.mxu0 %v1546
  %v1599 = vpop.f32.mrf.mxu0
  %v1600 = vadd.f32 %v1516, %v1599
  %v1601 = vpop.f32.mrf.mxu0
  %v1602 = vadd.f32 %v1516, %v1601
  %1603 = vmatmul.bf16.gmra.mxu0 %v1549
  %v1604 = vpop.f32.mrf.mxu0
  %v1605 = vadd.f32 %v1516, %v1604
  %v1606 = vpop.f32.mrf.mxu0
  %v1607 = vadd.f32 %v1516, %v1606
  %1608 = vdwg.mxu0
  %v1609 = vmax.f32 %v1561, 0.0
  %v1610 = vmax.f32 %v1590, 0.0
  %v1611 = vmax.f32 %v1563, 0.0
  %v1612 = vmax.f32 %v1592, 0.0
  %v1613 = vmax.f32 %v1566, 0.0
  %v1614 = vmax.f32 %v1595, 0.0
  %v1615 = vmax.f32 %v1568, 0.0
  %v1616 = vmax.f32 %v1597, 0.0
  %v1617 = vmax.f32 %v1571, 0.0
  %v1618 = vmax.f32 %v1600, 0.0
  %v1619 = vmax.f32 %v1573, 0.0
  %v1620 = vmax.f32 %v1602, 0.0
  %v1621 = vmax.f32 %v1576, 0.0
  %v1622 = vmax.f32 %v1605, 0.0
  %v1623 = vmax.f32 %v1578, 0.0
  %v1624 = vmax.f32 %v1607, 0.0
  %v1625 = vpack.c.bf16 %v1611, %v1609
  %v1626 = vpack.c.bf16 %v1612, %v1610
  %v1627 = vpack.c.bf16 %v1615, %v1613
  %v1628 = vpack.c.bf16 %v1616, %v1614
  %v1629 = vpack.c.bf16 %v1619, %v1617
  %v1630 = vpack.c.bf16 %v1620, %v1618
  %v1631 = vpack.c.bf16 %v1623, %v1621
  %v1632 = vpack.c.bf16 %v1624, %v1622
  %v1633 = vld [vmem:[%s11] sm:$0xf]
  %v1634 = vld [vmem:[%s11 + $0x4] sm:$0xf]
  %v1635 = vld [vmem:[%s11 + $0x8] sm:$0xf]
  %v1636 = vld [vmem:[%s11 + $0xc] sm:$0xf]
  %v1637 = vld [vmem:[%s11 + $0x10] sm:$0xf]
  %v1638 = vld [vmem:[%s11 + $0x14] sm:$0xf]
  %v1639 = vld [vmem:[%s11 + $0x18] sm:$0xf]
  %v1640 = vld [vmem:[%s11 + $0x1c] sm:$0xf]
  %v1641 = vld [vmem:[%s11 + $0x20] sm:$0xf]
  %v1642 = vld [vmem:[%s11 + $0x24] sm:$0xf]
  %v1643 = vld [vmem:[%s11 + $0x28] sm:$0xf]
  %v1644 = vld [vmem:[%s11 + $0x2c] sm:$0xf]
  %v1645 = vld [vmem:[%s11 + $0x30] sm:$0xf]
  %v1646 = vld [vmem:[%s11 + $0x34] sm:$0xf]
  %v1647 = vld [vmem:[%s11 + $0x38] sm:$0xf]
  %v1648 = vld [vmem:[%s11 + $0x3c] sm:$0xf]
  %v1649 = vld [vmem:[%s11 + $0x40] sm:$0xf]
  %v1650 = vld [vmem:[%s11 + $0x44] sm:$0xf]
  %v1651 = vld [vmem:[%s11 + $0x48] sm:$0xf]
  %v1652 = vld [vmem:[%s11 + $0x4c] sm:$0xf]
  %v1653 = vld [vmem:[%s11 + $0x50] sm:$0xf]
  %v1654 = vld [vmem:[%s11 + $0x54] sm:$0xf]
  %v1655 = vld [vmem:[%s11 + $0x58] sm:$0xf]
  %v1656 = vld [vmem:[%s11 + $0x5c] sm:$0xf]
  %v1657 = vld [vmem:[%s11 + $0x60] sm:$0xf]
  %v1658 = vld [vmem:[%s11 + $0x64] sm:$0xf]
  %v1659 = vld [vmem:[%s11 + $0x68] sm:$0xf]
  %v1660 = vld [vmem:[%s11 + $0x6c] sm:$0xf]
  %v1661 = vld [vmem:[%s11 + $0x70] sm:$0xf]
  %v1662 = vld [vmem:[%s11 + $0x74] sm:$0xf]
  %v1663 = vld [vmem:[%s11 + $0x78] sm:$0xf]
  %v1664 = vld [vmem:[%s11 + $0x7c] sm:$0xf]
  %v1665 = vld [vmem:[%s12] sm:$0x1]
  %v1667 = vperm.slane %v1665, 0
  %v1701 = vunpack.c.l.b16 %v1633
  %v1702 = vunpack.c.l.b16 %v1634
  %v1703 = vunpack.c.l.b16 %v1635
  %v1704 = vunpack.c.l.b16 %v1636
  %v1705 = vunpack.c.l.b16 %v1637
  %v1706 = vunpack.c.l.b16 %v1638
  %v1707 = vunpack.c.l.b16 %v1639
  %v1708 = vunpack.c.l.b16 %v1640
  %v1709 = vunpack.c.l.b16 %v1641
  %v1710 = vunpack.c.l.b16 %v1642
  %v1711 = vunpack.c.l.b16 %v1643
  %v1712 = vunpack.c.l.b16 %v1644
  %v1713 = vunpack.c.l.b16 %v1645
  %v1714 = vunpack.c.l.b16 %v1646
  %v1715 = vunpack.c.l.b16 %v1647
  %v1716 = vunpack.c.l.b16 %v1648
  %v1717 = vunpack.c.l.b16 %v1649
  %v1718 = vunpack.c.l.b16 %v1650
  %v1719 = vunpack.c.l.b16 %v1651
  %v1720 = vunpack.c.l.b16 %v1652
  %v1721 = vunpack.c.l.b16 %v1653
  %v1722 = vunpack.c.l.b16 %v1654
  %v1723 = vunpack.c.l.b16 %v1655
  %v1724 = vunpack.c.l.b16 %v1656
  %v1725 = vunpack.c.l.b16 %v1657
  %v1726 = vunpack.c.l.b16 %v1658
  %v1727 = vunpack.c.l.b16 %v1659
  %v1728 = vunpack.c.l.b16 %v1660
  %v1729 = vunpack.c.l.b16 %v1661
  %v1730 = vunpack.c.l.b16 %v1662
  %v1731 = vunpack.c.l.b16 %v1663
  %v1732 = vunpack.c.l.b16 %v1664
  %v1733 = vpack.c.b16 %v1702, %v1701
  %v1734 = vpack.c.b16 %v1704, %v1703
  %v1735 = vpack.c.b16 %v1706, %v1705
  %v1736 = vpack.c.b16 %v1708, %v1707
  %v1737 = vpack.c.b16 %v1710, %v1709
  %v1738 = vpack.c.b16 %v1712, %v1711
  %v1739 = vpack.c.b16 %v1714, %v1713
  %v1740 = vpack.c.b16 %v1716, %v1715
  %v1741 = vpack.c.b16 %v1718, %v1717
  %v1742 = vpack.c.b16 %v1720, %v1719
  %v1743 = vpack.c.b16 %v1722, %v1721
  %v1744 = vpack.c.b16 %v1724, %v1723
  %v1745 = vpack.c.b16 %v1726, %v1725
  %v1746 = vpack.c.b16 %v1728, %v1727
  %v1747 = vpack.c.b16 %v1730, %v1729
  %v1748 = vpack.c.b16 %v1732, %v1731
  %1765 = vmatpush.bf16.msra.mxu0 %v1740
  %1766 = vmatpush.bf16.msra.mxu0 %v1739
  %1767 = vmatpush.bf16.msra.mxu0 %v1738
  %1768 = vmatpush.bf16.msra.mxu0 %v1737
  %1769 = vmatpush.bf16.msra.mxu0 %v1736
  %1770 = vmatpush.bf16.msra.mxu0 %v1735
  %1771 = vmatpush.bf16.msra.mxu0 %v1734
  %1772 = vmatpush.bf16.msra.mxu0 %v1733
  %1773 = vmatmul.bf16.gmra.mxu0 %v1625
  %v1774 = vpop.f32.mrf.mxu0
  %v1775 = vadd.f32 %v1667, %v1774
  %v1776 = vpop.f32.mrf.mxu0
  %v1777 = vadd.f32 %v1667, %v1776
  %1778 = vmatmul.bf16.gmra.mxu0 %v1627
  %v1779 = vpop.f32.mrf.mxu0
  %v1780 = vadd.f32 %v1667, %v1779
  %v1781 = vpop.f32.mrf.mxu0
  %v1782 = vadd.f32 %v1667, %v1781
  %1783 = vmatmul.bf16.gmra.mxu0 %v1629
  %v1784 = vpop.f32.mrf.mxu0
  %v1785 = vadd.f32 %v1667, %v1784
  %v1786 = vpop.f32.mrf.mxu0
  %v1787 = vadd.f32 %v1667, %v1786
  %1788 = vmatmul.bf16.gmra.mxu0 %v1631
  %v1789 = vpop.f32.mrf.mxu0
  %v1790 = vadd.f32 %v1667, %v1789
  %v1791 = vpop.f32.mrf.mxu0
  %v1792 = vadd.f32 %v1667, %v1791
  %1793 = vdwg.mxu0
  %1794 = vmatpush.bf16.msra.mxu0 %v1748
  %1795 = vmatpush.bf16.msra.mxu0 %v1747
  %1796 = vmatpush.bf16.msra.mxu0 %v1746
  %1797 = vmatpush.bf16.msra.mxu0 %v1745
  %1798 = vmatpush.bf16.msra.mxu0 %v1744
  %1799 = vmatpush.bf16.msra.mxu0 %v1743
  %1800 = vmatpush.bf16.msra.mxu0 %v1742
  %1801 = vmatpush.bf16.msra.mxu0 %v1741
  %1802 = vmatmul.bf16.gmra.mxu0 %v1626
  %v1803 = vpop.f32.mrf.mxu0
  %v1804 = vadd.f32 %v1775, %v1803
  %v1805 = vpop.f32.mrf.mxu0
  %v1806 = vadd.f32 %v1777, %v1805
  %1807 = vmatmul.bf16.gmra.mxu0 %v1628
  %v1808 = vpop.f32.mrf.mxu0
  %v1809 = vadd.f32 %v1780, %v1808
  %v1810 = vpop.f32.mrf.mxu0
  %v1811 = vadd.f32 %v1782, %v1810
  %1812 = vmatmul.bf16.gmra.mxu0 %v1630
  %v1813 = vpop.f32.mrf.mxu0
  %v1814 = vadd.f32 %v1785, %v1813
  %v1815 = vpop.f32.mrf.mxu0
  %v1816 = vadd.f32 %v1787, %v1815
  %1817 = vmatmul.bf16.gmra.mxu0 %v1632
  %v1818 = vpop.f32.mrf.mxu0
  %v1819 = vadd.f32 %v1790, %v1818
  %v1820 = vpop.f32.mrf.mxu0
  %v1821 = vadd.f32 %v1792, %v1820
  %1822 = vdwg.mxu0
  %v1823 = vld [vmem:[%s0] sm:$0xff]
  %v1824 = vld [vmem:[%s0 + $0x8] sm:$0xff]
  %v1825 = vld [vmem:[%s0 + $0x10] sm:$0xff]
  %v1826 = vld [vmem:[%s0 + $0x18] sm:$0xff]
  %v1827 = vld [vmem:[%s0 + $0x20] sm:$0xff]
  %v1828 = vld [vmem:[%s0 + $0x28] sm:$0xff]
  %v1829 = vld [vmem:[%s0 + $0x30] sm:$0xff]
  %v1830 = vld [vmem:[%s0 + $0x38] sm:$0xff]
  %v1831 = vadd.f32 %v1823, %v1804
  %v1832 = vadd.f32 %v1824, %v1806
  %v1833 = vadd.f32 %v1825, %v1809
  %v1834 = vadd.f32 %v1826, %v1811
  %v1835 = vadd.f32 %v1827, %v1814
  %v1836 = vadd.f32 %v1828, %v1816
  %v1837 = vadd.f32 %v1829, %v1819
  %v1838 = vadd.f32 %v1830, %v1821
  %v1839 = vsel %vm99, %v1831, 0.0
  %1840 = vadd.xlane.f32.xlu0 %v1839
  %v1841 = vpop.xlane.xlu0 %1840
  %v1842 = vsel %vm99, %v1832, 0.0
  %1843 = vadd.xlane.f32.xlu0 %v1842
  %v1844 = vpop.xlane.xlu0 %1843
  %v1845 = vsel %vm99, %v1833, 0.0
  %1846 = vadd.xlane.f32.xlu0 %v1845
  %v1847 = vpop.xlane.xlu0 %1846
  %v1848 = vsel %vm99, %v1834, 0.0
  %1849 = vadd.xlane.f32.xlu0 %v1848
  %v1850 = vpop.xlane.xlu0 %1849
  %v1851 = vsel %vm99, %v1835, 0.0
  %1852 = vadd.xlane.f32.xlu0 %v1851
  %v1853 = vpop.xlane.xlu0 %1852
  %v1854 = vsel %vm99, %v1836, 0.0
  %1855 = vadd.xlane.f32.xlu0 %v1854
  %v1856 = vpop.xlane.xlu0 %1855
  %v1857 = vsel %vm99, %v1837, 0.0
  %1858 = vadd.xlane.f32.xlu0 %v1857
  %v1859 = vpop.xlane.xlu0 %1858
  %v1860 = vsel %vm99, %v1838, 0.0
  %1861 = vadd.xlane.f32.xlu0 %v1860
  %v1862 = vpop.xlane.xlu0 %1861
  %v1863 = vrcp.pop 64.0
  %v1864 = vmul.f32 64.0, %v1863
  %v1865 = vsub.f32 1.0, %v1864
  %v1866 = vmul.f32 %v1863, %v1865
  %v1867 = vadd.f32 %v1863, %v1866
  %vm1868 = vweird.f32 %v1863
  %v1869 = vsel %vm1868, %v1863, %v1867
  %v1870 = vmul.f32 %v1841, %v1869
  %v1871 = vmul.f32 %v1844, %v1869
  %v1872 = vmul.f32 %v1847, %v1869
  %v1873 = vmul.f32 %v1850, %v1869
  %v1874 = vmul.f32 %v1853, %v1869
  %v1875 = vmul.f32 %v1856, %v1869
  %v1876 = vmul.f32 %v1859, %v1869
  %v1877 = vmul.f32 %v1862, %v1869
  %v1878 = vsub.f32 %v1831, %v1870
  %v1879 = vsub.f32 %v1832, %v1871
  %v1880 = vsub.f32 %v1833, %v1872
  %v1881 = vsub.f32 %v1834, %v1873
  %v1882 = vsub.f32 %v1835, %v1874
  %v1883 = vsub.f32 %v1836, %v1875
  %v1884 = vsub.f32 %v1837, %v1876
  %v1885 = vsub.f32 %v1838, %v1877
  %v1886 = vmul.f32 %v1878, %v1878
  %v1887 = vmul.f32 %v1879, %v1879
  %v1888 = vmul.f32 %v1880, %v1880
  %v1889 = vmul.f32 %v1881, %v1881
  %v1890 = vmul.f32 %v1882, %v1882
  %v1891 = vmul.f32 %v1883, %v1883
  %v1892 = vmul.f32 %v1884, %v1884
  %v1893 = vmul.f32 %v1885, %v1885
  %v1894 = vsel %vm99, %v1886, 0.0
  %1895 = vadd.xlane.f32.xlu0 %v1894
  %v1896 = vpop.xlane.xlu0 %1895
  %v1897 = vsel %vm99, %v1887, 0.0
  %1898 = vadd.xlane.f32.xlu0 %v1897
  %v1899 = vpop.xlane.xlu0 %1898
  %v1900 = vsel %vm99, %v1888, 0.0
  %1901 = vadd.xlane.f32.xlu0 %v1900
  %v1902 = vpop.xlane.xlu0 %1901
  %v1903 = vsel %vm99, %v1889, 0.0
  %1904 = vadd.xlane.f32.xlu0 %v1903
  %v1905 = vpop.xlane.xlu0 %1904
  %v1906 = vsel %vm99, %v1890, 0.0
  %1907 = vadd.xlane.f32.xlu0 %v1906
  %v1908 = vpop.xlane.xlu0 %1907
  %v1909 = vsel %vm99, %v1891, 0.0
  %1910 = vadd.xlane.f32.xlu0 %v1909
  %v1911 = vpop.xlane.xlu0 %1910
  %v1912 = vsel %vm99, %v1892, 0.0
  %1913 = vadd.xlane.f32.xlu0 %v1912
  %v1914 = vpop.xlane.xlu0 %1913
  %v1915 = vsel %vm99, %v1893, 0.0
  %1916 = vadd.xlane.f32.xlu0 %v1915
  %v1917 = vpop.xlane.xlu0 %1916
  %v1918 = vmul.f32 %v1896, %v1869
  %v1919 = vmul.f32 %v1899, %v1869
  %v1920 = vmul.f32 %v1902, %v1869
  %v1921 = vmul.f32 %v1905, %v1869
  %v1922 = vmul.f32 %v1908, %v1869
  %v1923 = vmul.f32 %v1911, %v1869
  %v1924 = vmul.f32 %v1914, %v1869
  %v1925 = vmul.f32 %v1917, %v1869
  %v1926 = vadd.f32 %v1918, 1e-05
  %v1927 = vadd.f32 %v1919, 1e-05
  %v1928 = vadd.f32 %v1920, 1e-05
  %v1929 = vadd.f32 %v1921, 1e-05
  %v1930 = vadd.f32 %v1922, 1e-05
  %v1931 = vadd.f32 %v1923, 1e-05
  %v1932 = vadd.f32 %v1924, 1e-05
  %v1933 = vadd.f32 %v1925, 1e-05
  %v1934 = vrsqrt.pop %v1926
  %v1935 = vmul.f32 %v1934, %v1926
  %v1936 = vmul.f32 %v1935, %v1934
  %v1937 = vmul.f32 0.5, %v1936
  %v1938 = vsub.f32 1.5, %v1937
  %v1939 = vmul.f32 %v1934, %v1938
  %vm1940 = vweird.f32 %v1926
  %vm1941 = vweird.f32 %v1934
  %vm1942 = vmor %vm1940, %vm1941
  %v1943 = vsel %vm1942, %v1934, %v1939
  %v1944 = vrsqrt.pop %v1927
  %v1945 = vmul.f32 %v1944, %v1927
  %v1946 = vmul.f32 %v1945, %v1944
  %v1947 = vmul.f32 0.5, %v1946
  %v1948 = vsub.f32 1.5, %v1947
  %v1949 = vmul.f32 %v1944, %v1948
  %vm1950 = vweird.f32 %v1927
  %vm1951 = vweird.f32 %v1944
  %vm1952 = vmor %vm1950, %vm1951
  %v1953 = vsel %vm1952, %v1944, %v1949
  %v1954 = vrsqrt.pop %v1928
  %v1955 = vmul.f32 %v1954, %v1928
  %v1956 = vmul.f32 %v1955, %v1954
  %v1957 = vmul.f32 0.5, %v1956
  %v1958 = vsub.f32 1.5, %v1957
  %v1959 = vmul.f32 %v1954, %v1958
  %vm1960 = vweird.f32 %v1928
  %vm1961 = vweird.f32 %v1954
  %vm1962 = vmor %vm1960, %vm1961
  %v1963 = vsel %vm1962, %v1954, %v1959
  %v1964 = vrsqrt.pop %v1929
  %v1965 = vmul.f32 %v1964, %v1929
  %v1966 = vmul.f32 %v1965, %v1964
  %v1967 = vmul.f32 0.5, %v1966
  %v1968 = vsub.f32 1.5, %v1967
  %v1969 = vmul.f32 %v1964, %v1968
  %vm1970 = vweird.f32 %v1929
  %vm1971 = vweird.f32 %v1964
  %vm1972 = vmor %vm1970, %vm1971
  %v1973 = vsel %vm1972, %v1964, %v1969
  %v1974 = vrsqrt.pop %v1930
  %v1975 = vmul.f32 %v1974, %v1930
  %v1976 = vmul.f32 %v1975, %v1974
  %v1977 = vmul.f32 0.5, %v1976
  %v1978 = vsub.f32 1.5, %v1977
  %v1979 = vmul.f32 %v1974, %v1978
  %vm1980 = vweird.f32 %v1930
  %vm1981 = vweird.f32 %v1974
  %vm1982 = vmor %vm1980, %vm1981
  %v1983 = vsel %vm1982, %v1974, %v1979
  %v1984 = vrsqrt.pop %v1931
  %v1985 = vmul.f32 %v1984, %v1931
  %v1986 = vmul.f32 %v1985, %v1984
  %v1987 = vmul.f32 0.5, %v1986
  %v1988 = vsub.f32 1.5, %v1987
  %v1989 = vmul.f32 %v1984, %v1988
  %vm1990 = vweird.f32 %v1931
  %vm1991 = vweird.f32 %v1984
  %vm1992 = vmor %vm1990, %vm1991
  %v1993 = vsel %vm1992, %v1984, %v1989
  %v1994 = vrsqrt.pop %v1932
  %v1995 = vmul.f32 %v1994, %v1932
  %v1996 = vmul.f32 %v1995, %v1994
  %v1997 = vmul.f32 0.5, %v1996
  %v1998 = vsub.f32 1.5, %v1997
  %v1999 = vmul.f32 %v1994, %v1998
  %vm2000 = vweird.f32 %v1932
  %vm2001 = vweird.f32 %v1994
  %vm2002 = vmor %vm2000, %vm2001
  %v2003 = vsel %vm2002, %v1994, %v1999
  %v2004 = vrsqrt.pop %v1933
  %v2005 = vmul.f32 %v2004, %v1933
  %v2006 = vmul.f32 %v2005, %v2004
  %v2007 = vmul.f32 0.5, %v2006
  %v2008 = vsub.f32 1.5, %v2007
  %v2009 = vmul.f32 %v2004, %v2008
  %vm2010 = vweird.f32 %v1933
  %vm2011 = vweird.f32 %v2004
  %vm2012 = vmor %vm2010, %vm2011
  %v2013 = vsel %vm2012, %v2004, %v2009
  %v2014 = vmul.f32 %v1878, %v1943
  %v2015 = vmul.f32 %v1879, %v1953
  %v2016 = vmul.f32 %v1880, %v1963
  %v2017 = vmul.f32 %v1881, %v1973
  %v2018 = vmul.f32 %v1882, %v1983
  %v2019 = vmul.f32 %v1883, %v1993
  %v2020 = vmul.f32 %v1884, %v2003
  %v2021 = vmul.f32 %v1885, %v2013
  %v2022 = vld [vmem:[%s13] sm:$0x1]
  %v2024 = vperm.slane %v2022, 0
  %v2026 = vmul.f32 %v2014, %v2024
  %v2027 = vmul.f32 %v2015, %v2024
  %v2028 = vmul.f32 %v2016, %v2024
  %v2029 = vmul.f32 %v2017, %v2024
  %v2030 = vmul.f32 %v2018, %v2024
  %v2031 = vmul.f32 %v2019, %v2024
  %v2032 = vmul.f32 %v2020, %v2024
  %v2033 = vmul.f32 %v2021, %v2024
  %v2034 = vld [vmem:[%s14] sm:$0x1]
  %v2036 = vperm.slane %v2034, 0
  %v2038 = vadd.f32 %v2026, %v2036
  %v2039 = vadd.f32 %v2027, %v2036
  %v2040 = vadd.f32 %v2028, %v2036
  %v2041 = vadd.f32 %v2029, %v2036
  %v2042 = vadd.f32 %v2030, %v2036
  %v2043 = vadd.f32 %v2031, %v2036
  %v2044 = vadd.f32 %v2032, %v2036
  %v2045 = vadd.f32 %v2033, %v2036
  %2046 = vst.msk [vmem:[%s15] sm:$0xff] %vm99, %v2038
  %2047 = vst.msk [vmem:[%s15 + $0x8] sm:$0xff] %vm99, %v2039
  %2048 = vst.msk [vmem:[%s15 + $0x10] sm:$0xff] %vm99, %v2040
  %2049 = vst.msk [vmem:[%s15 + $0x18] sm:$0xff] %vm99, %v2041
  %2050 = vst.msk [vmem:[%s15 + $0x20] sm:$0xff] %vm99, %v2042
  %2051 = vst.msk [vmem:[%s15 + $0x28] sm:$0xff] %vm99, %v2043
  %2052 = vst.msk [vmem:[%s15 + $0x30] sm:$0xff] %vm99, %v2044
  %2053 = vst.msk [vmem:[%s15 + $0x38] sm:$0xff] %vm99, %v2045
  // Predicated region
  $region62: #{residual_lstm_forward.1} parent=0 // pred_check
    _
  $region63: #{residual_lstm_forward.1} parent=0 // pred_check_branch
    %2055 = sbr.rel (0) target = $region65
  $region64: #{residual_lstm_forward.1} parent=0 // pred_region
    _
  $region65: #{residual_lstm_forward.1} parent=0 // pred_fallthru
    _
  // Predicated region
  $region66: #{residual_lstm_forward.1} parent=0 // pred_check
    _
  $region67: #{residual_lstm_forward.1} parent=0 // pred_check_branch
    %2057 = sbr.rel (0) target = $region69
  $region68: #{residual_lstm_forward.1} parent=0 // pred_region
    _
  $region69: #{residual_lstm_forward.1} parent=0 // pred_fallthru
    _

</llo_original>
